<compile_context>
chip_gen: v7x
topology: tpu7x:2x2x1
jax: 0.10.0
libtpu: 0.0.40
codegen_flags: <defaults>
</compile_context>

<pallas_src>
import functools

import jax
import jax.numpy as jnp
from jax.experimental import pallas as pl
from jax.experimental.pallas import tpu as pltpu


# ---------------------------------------------------------------------------
# Fused wavefront multi-layer LSTM kernel (single grid step, VMEM resident)
# ---------------------------------------------------------------------------
def _encoder_wavefront_kernel(x_ref, w0_ref, wbig_ref, b_ref, z0_ref, c0_ref,
                              out_ref, state_ref, *, S, Bp, H, L):
    LH = L * H

    # Prologue (off the recurrence): hoisted layer-0 input projection for the
    # whole sequence + every layer's bias, already in the fused gate-type-major
    # column layout.  One MXU matmul: (S*Bp, E) @ (E, 4*L*H).
    GX = jnp.dot(x_ref[...], w0_ref[...],
                 preferred_element_type=jnp.float32) + b_ref[...]
    W = wbig_ref[...]                       # (L*H, 4*L*H) fused recurrent weights

    z = z0_ref[...]                         # (Bp, L*H) concat of all layers' h
    c = c0_ref[...]                         # (Bp, L*H) concat of all layers' c
    lane = jax.lax.broadcasted_iota(jnp.int32, (Bp, LH), 1)   # hoisted once

    outs = []
    # Wavefront: super-step s updates layer l at timestep (s - l).
    for s in range(S + L - 1):
        r = min(s, S - 1)                   # layer-0 timestep (clamped; masked if idle)
        gx = GX[r * Bp:(r + 1) * Bp, :]     # (Bp, 4*L*H), vreg-aligned row slice

        # ONE fused recurrent matmul for all layers (block-diag W_hh + feed W_ih).
        G = gx + jnp.dot(z, W, preferred_element_type=jnp.float32)

        # Full-width nonlinearities (EUP), gate-type-major slices for the combine.
        sig = jax.nn.sigmoid(G)
        tnh = jnp.tanh(G)
        i_g = sig[:, 0 * LH:1 * LH]
        f_g = sig[:, 1 * LH:2 * LH]
        g_g = tnh[:, 2 * LH:3 * LH]
        o_g = sig[:, 3 * LH:4 * LH]

        c_new = f_g * c + i_g * g_g         # all-layer update at (Bp, L*H) width
        h_new = o_g * jnp.tanh(c_new)

        # Active layers this super-step: l in [lo, hi] (static, loop unrolled).
        lo = max(0, s - S + 1)
        hi = min(L - 1, s)
        if lo == 0 and hi == L - 1:
            z, c = h_new, c_new
        else:                               # wavefront edge: constant lane mask
            m = (lane >= lo * H) & (lane < (hi + 1) * H)
            z = jnp.where(m, h_new, z)
            c = jnp.where(m, c_new, c)

        if s >= L - 1:                      # top layer just produced timestep s-(L-1)
            outs.append(z)                  # keep in registers; store once below

    # Lane-dense epilogue: one (Bp, S*L*H) store and one (Bp, 2*L*H) store.
    out_ref[...] = jnp.concatenate(outs, axis=-1)
    state_ref[...] = jnp.concatenate([z, c], axis=-1)


# ---------------------------------------------------------------------------
# Fused-weight packing (gate-type-major columns: i_* | f_* | g_* | o_*)
# ---------------------------------------------------------------------------
def _build_fused_weights(params, E, H, L):
    """params[l] = (W_ih_l (in_l, 4H), W_hh_l (H, 4H), b_sum_l (1, 4H)),
    PyTorch gate order (i, f, g, o) along the 4H axis, pre-transposed.

    Column layout: col(t, l, j) = t*L*H + l*H + j, t in {i,f,g,o}.
      W0_exp (E, 4LH):   layer-0 input projection (other layers' cols zero).
      W_big (LH, 4LH):   rows [l*H,(l+1)*H) -> W_hh_l (recurrent);
                         rows [(l-1)*H, l*H) -> W_ih_l (feed from layer l-1).
      B_all (1, 4LH):    every layer's (b_ih + b_hh).
    """
    LH = L * H
    W0 = jnp.zeros((E, 4 * LH), jnp.float32)
    Wb = jnp.zeros((LH, 4 * LH), jnp.float32)
    Ba = jnp.zeros((1, 4 * LH), jnp.float32)
    for l, (w_ih, w_hh, b_sum) in enumerate(params):
        for t in range(4):
            cols = slice(t * LH + l * H, t * LH + (l + 1) * H)
            src = slice(t * H, (t + 1) * H)
            Wb = Wb.at[l * H:(l + 1) * H, cols].set(w_hh[:, src])
            if l == 0:
                W0 = W0.at[:, cols].set(w_ih[:, src])
            else:
                Wb = Wb.at[(l - 1) * H:l * H, cols].set(w_ih[:, src])
            Ba = Ba.at[:, cols].set(b_sum[:, src])
    return W0, Wb, Ba


# ---------------------------------------------------------------------------
# Encoder wrapper (multi-layer unidirectional LSTM, PyTorch semantics)
# ---------------------------------------------------------------------------
def encoder_forward(enc_input_embed, params, h0, c0):
    """enc_input_embed: (batch, seq, embed). Returns (en_outputs, (h_n, c_n))."""
    B, S, E = enc_input_embed.shape
    L, _, H = h0.shape
    LH = L * H

    # Pad batch to the f32 sublane width (8); padded rows compute independent
    # garbage and are sliced off below.
    Bp = ((B + 7) // 8) * 8
    pad_b = Bp - B

    x_tm = jnp.transpose(enc_input_embed, (1, 0, 2))            # (S, B, E)
    x_tm = jnp.pad(x_tm, ((0, 0), (0, pad_b), (0, 0)))
    x_flat = x_tm.reshape(S * Bp, E)                            # row t*Bp+b = (t, b)

    z0 = jnp.pad(h0, ((0, 0), (0, pad_b), (0, 0))).transpose(1, 0, 2).reshape(Bp, LH)
    c0p = jnp.pad(c0, ((0, 0), (0, pad_b), (0, 0))).transpose(1, 0, 2).reshape(Bp, LH)

    W0, Wb, Ba = _build_fused_weights(params, E, H, L)

    kernel = functools.partial(_encoder_wavefront_kernel, S=S, Bp=Bp, H=H, L=L)

    out_seq, state = pl.pallas_call(
        kernel,
        out_shape=(jax.ShapeDtypeStruct((Bp, S * LH), jnp.float32),
                   jax.ShapeDtypeStruct((Bp, 2 * LH), jnp.float32)),
        grid_spec=pltpu.PrefetchScalarGridSpec(
            num_scalar_prefetch=0,
            grid=(1,),                                          # whole problem resident
            in_specs=[
                pl.BlockSpec((S * Bp, E), lambda i: (0, 0)),    # x (time-major)
                pl.BlockSpec((E, 4 * LH), lambda i: (0, 0)),    # W0_exp (resident)
                pl.BlockSpec((LH, 4 * LH), lambda i: (0, 0)),   # W_big (resident)
                pl.BlockSpec((1, 4 * LH), lambda i: (0, 0)),    # all biases
                pl.BlockSpec((Bp, LH), lambda i: (0, 0)),       # z0 = concat h0
                pl.BlockSpec((Bp, LH), lambda i: (0, 0)),       # c0 concat
            ],
            out_specs=[
                pl.BlockSpec((Bp, S * LH), lambda i: (0, 0)),   # lane-dense seq out
                pl.BlockSpec((Bp, 2 * LH), lambda i: (0, 0)),   # [h_n | c_n]
            ],
        ),
        compiler_params=pltpu.CompilerParams(
            dimension_semantics=("arbitrary",)),
    )(x_flat, W0, Wb, Ba, z0, c0p)

    # Undo the lane-dense packing (cheap XLA reshapes / slices).
    en_outputs = out_seq.reshape(Bp, S, L, H)[:B, :, L - 1, :]          # (B, S, H)
    h_n = state[:, :LH].reshape(Bp, L, H).transpose(1, 0, 2)[:, :B, :]  # (L, B, H)
    c_n = state[:, LH:].reshape(Bp, L, H).transpose(1, 0, 2)[:, :B, :]
    return en_outputs, (h_n, c_n)


# ---------------------------------------------------------------------------
# Pure-JAX reference (correctness check only)
# ---------------------------------------------------------------------------
def lstm_ref(x_bf, params, h0, c0):
    x = jnp.transpose(x_bf, (1, 0, 2))
    layer_in = x
    h_fs, c_fs = [], []
    for l, (w_ih, w_hh, b_sum) in enumerate(params):
        H = h0.shape[-1]

        def step(carry, x_t):
            h, c = carry
            gates = x_t @ w_ih + h @ w_hh + b_sum[0]
            i = jax.nn.sigmoid(gates[:, 0 * H:1 * H])
            f = jax.nn.sigmoid(gates[:, 1 * H:2 * H])
            g = jnp.tanh(gates[:, 2 * H:3 * H])
            o = jax.nn.sigmoid(gates[:, 3 * H:4 * H])
            c_new = f * c + i * g
            h_new = o * jnp.tanh(c_new)
            return (h_new, c_new), h_new

        (h_n, c_n), out = jax.lax.scan(step, (h0[l], c0[l]), layer_in)
        layer_in = out
        h_fs.append(h_n)
        c_fs.append(c_n)
    return (jnp.transpose(layer_in, (1, 0, 2)),
            (jnp.stack(h_fs), jnp.stack(c_fs)))


if __name__ == "__main__":
    # Shapes implied by the module: embeddingSize=32, hiddenSize=32,
    # enc_numlayer=2, bidirectional=False, batch=4, seq=8.
    B, S, E, H, L = 4, 8, 32, 32, 2

    key = jax.random.PRNGKey(0)
    k_x, k_h, k_c, k_w = jax.random.split(key, 4)

    enc_input_embed = jax.random.normal(k_x, (B, S, E), dtype=jnp.float32)

    # TODO(synk): torch.randn initial hidden in encode() replaced by a
    # deterministic jax.random draw (same semantics: random (h0, c0)).
    h0 = jax.random.normal(k_h, (L, B, H), dtype=jnp.float32)
    c0 = jax.random.normal(k_c, (L, B, H), dtype=jnp.float32)

    # Deterministic LSTM parameters (PyTorch shapes: W_ih [4H, in], W_hh [4H, H],
    # b_ih, b_hh [4H]); stored pre-transposed + bias pre-summed for the kernel.
    params = []
    wkeys = jax.random.split(k_w, L * 4)
    scale = 1.0 / jnp.sqrt(H)
    for l in range(L):
        in_size = E if l == 0 else H
        w_ih = (jax.random.normal(wkeys[4 * l + 0], (in_size, 4 * H)) * scale
                ).astype(jnp.float32)
        w_hh = (jax.random.normal(wkeys[4 * l + 1], (H, 4 * H)) * scale
                ).astype(jnp.float32)
        b_ih = (jax.random.normal(wkeys[4 * l + 2], (4 * H,)) * scale)
        b_hh = (jax.random.normal(wkeys[4 * l + 3], (4 * H,)) * scale)
        b_sum = (b_ih + b_hh).reshape(1, 4 * H).astype(jnp.float32)
        params.append((w_ih, w_hh, b_sum))

    en_outputs, (h_n, c_n) = encoder_forward(enc_input_embed, params, h0, c0)
    jax.block_until_ready((en_outputs, h_n, c_n))

    # Validate against pure-JAX reference (tolerance allows the fused-contraction
    # summation-order difference of the block-matrix recurrent matmul).
    ref_out, (ref_h, ref_c) = lstm_ref(enc_input_embed, params, h0, c0)
    assert en_outputs.shape == (B, S, H)
    assert h_n.shape == (L, B, H) and c_n.shape == (L, B, H)
    assert jnp.allclose(en_outputs, ref_out, atol=1e-4, rtol=1e-4)
    assert jnp.allclose(h_n, ref_h, atol=1e-4, rtol=1e-4)
    assert jnp.allclose(c_n, ref_c, atol=1e-4, rtol=1e-4)

    print("KERNEL_OK")
</pallas_src>

<mosaic_0001>
module attributes {stable_mosaic.version = 11 : i64} {
  func.func @_encoder_wavefront_kernel(%arg0: i32, %arg1: memref<64x32xf32, #tpu.memory_space<vmem>>, %arg2: memref<32x256xf32, #tpu.memory_space<vmem>>, %arg3: memref<64x256xf32, #tpu.memory_space<vmem>>, %arg4: memref<1x256xf32, #tpu.memory_space<vmem>>, %arg5: memref<8x64xf32, #tpu.memory_space<vmem>>, %arg6: memref<8x64xf32, #tpu.memory_space<vmem>>, %arg7: memref<8x512xf32, #tpu.memory_space<vmem>>, %arg8: memref<8x128xf32, #tpu.memory_space<vmem>>) attributes {dimension_semantics = [#tpu.dimension_semantics<arbitrary>], iteration_bounds = array<i64: 1>, scalar_prefetch = 0 : i64, scratch_operands = 0 : i64, tpu.core_type = #tpu.core_type<tc>, window_params = [{pipeline_mode = #tpu.pipeline_mode<synchronous>, transform_indices = @transform_0, window_bounds = array<i64: 64, 32>}, {pipeline_mode = #tpu.pipeline_mode<synchronous>, transform_indices = @transform_1, window_bounds = array<i64: 32, 256>}, {pipeline_mode = #tpu.pipeline_mode<synchronous>, transform_indices = @transform_2, window_bounds = array<i64: 64, 256>}, {pipeline_mode = #tpu.pipeline_mode<synchronous>, transform_indices = @transform_3, window_bounds = array<i64: 1, 256>}, {pipeline_mode = #tpu.pipeline_mode<synchronous>, transform_indices = @transform_4, window_bounds = array<i64: 8, 64>}, {pipeline_mode = #tpu.pipeline_mode<synchronous>, transform_indices = @transform_5, window_bounds = array<i64: 8, 64>}, {pipeline_mode = #tpu.pipeline_mode<synchronous>, transform_indices = @transform_6, window_bounds = array<i64: 8, 512>}, {pipeline_mode = #tpu.pipeline_mode<synchronous>, transform_indices = @transform_7, window_bounds = array<i64: 8, 128>}]} {
    %c0 = arith.constant 0 : index
    %c0_0 = arith.constant 0 : index
    %0 = vector.load %arg1[%c0, %c0_0] : memref<64x32xf32, #tpu.memory_space<vmem>>, vector<64x32xf32>
    %c0_1 = arith.constant 0 : index
    %c0_2 = arith.constant 0 : index
    %1 = vector.load %arg2[%c0_1, %c0_2] : memref<32x256xf32, #tpu.memory_space<vmem>>, vector<32x256xf32>
    %cst = arith.constant dense<0.000000e+00> : vector<64x256xf32>
    %2 = tpu.matmul %0, %1, %cst {dimension_numbers = #tpu.dot_dimension_numbers<[1], [0], [0], [1], [0, 0, 1, 1], [], []>} : vector<64x32xf32>, vector<32x256xf32>, vector<64x256xf32> -> vector<64x256xf32>
    %c0_3 = arith.constant 0 : index
    %c0_4 = arith.constant 0 : index
    %3 = vector.load %arg4[%c0_3, %c0_4] : memref<1x256xf32, #tpu.memory_space<vmem>>, vector<1x256xf32>
    %4 = vector.broadcast %3 : vector<1x256xf32> to vector<64x256xf32>
    %5 = arith.addf %2, %4 : vector<64x256xf32>
    %c0_5 = arith.constant 0 : index
    %c0_6 = arith.constant 0 : index
    %6 = vector.load %arg3[%c0_5, %c0_6] : memref<64x256xf32, #tpu.memory_space<vmem>>, vector<64x256xf32>
    %c0_7 = arith.constant 0 : index
    %c0_8 = arith.constant 0 : index
    %7 = vector.load %arg5[%c0_7, %c0_8] : memref<8x64xf32, #tpu.memory_space<vmem>>, vector<8x64xf32>
    %c0_9 = arith.constant 0 : index
    %c0_10 = arith.constant 0 : index
    %8 = vector.load %arg6[%c0_9, %c0_10] : memref<8x64xf32, #tpu.memory_space<vmem>>, vector<8x64xf32>
    %9 = tpu.iota {dimensions = array<i32: 1>} : vector<8x64xi32>
    %10 = vector.extract_strided_slice %5 {offsets = [0, 0], sizes = [8, 256], strides = [1, 1]} : vector<64x256xf32> to vector<8x256xf32>
    %cst_11 = arith.constant dense<0.000000e+00> : vector<8x256xf32>
    %11 = tpu.matmul %7, %6, %cst_11 {dimension_numbers = #tpu.dot_dimension_numbers<[1], [0], [0], [1], [0, 0, 1, 1], [], []>} : vector<8x64xf32>, vector<64x256xf32>, vector<8x256xf32> -> vector<8x256xf32>
    %12 = arith.addf %10, %11 : vector<8x256xf32>
    %13 = arith.negf %12 : vector<8x256xf32>
    %14 = math.exp %13 : vector<8x256xf32>
    %cst_12 = arith.constant 1.000000e+00 : f32
    %15 = vector.broadcast %cst_12 : f32 to vector<8x256xf32>
    %16 = arith.addf %15, %14 : vector<8x256xf32>
    %17 = arith.divf %15, %16 : vector<8x256xf32>
    %18 = math.tanh %12 : vector<8x256xf32>
    %19 = vector.extract_strided_slice %17 {offsets = [0, 0], sizes = [8, 64], strides = [1, 1]} : vector<8x256xf32> to vector<8x64xf32>
    %20 = vector.extract_strided_slice %17 {offsets = [0, 64], sizes = [8, 64], strides = [1, 1]} : vector<8x256xf32> to vector<8x64xf32>
    %21 = vector.extract_strided_slice %18 {offsets = [0, 128], sizes = [8, 64], strides = [1, 1]} : vector<8x256xf32> to vector<8x64xf32>
    %22 = vector.extract_strided_slice %17 {offsets = [0, 192], sizes = [8, 64], strides = [1, 1]} : vector<8x256xf32> to vector<8x64xf32>
    %23 = arith.mulf %20, %8 : vector<8x64xf32>
    %24 = arith.mulf %19, %21 : vector<8x64xf32>
    %25 = arith.addf %23, %24 : vector<8x64xf32>
    %26 = math.tanh %25 : vector<8x64xf32>
    %27 = arith.mulf %22, %26 : vector<8x64xf32>
    %c0_i32 = arith.constant 0 : i32
    %28 = vector.broadcast %c0_i32 : i32 to vector<8x64xi32>
    %29 = arith.cmpi sge, %9, %28 : vector<8x64xi32>
    %c32_i32 = arith.constant 32 : i32
    %30 = vector.broadcast %c32_i32 : i32 to vector<8x64xi32>
    %31 = arith.cmpi slt, %9, %30 : vector<8x64xi32>
    %32 = arith.andi %29, %31 : vector<8x64xi1>
    %33 = arith.select %32, %27, %7 : vector<8x64xi1>, vector<8x64xf32>
    %34 = arith.select %32, %25, %8 : vector<8x64xi1>, vector<8x64xf32>
    %35 = vector.extract_strided_slice %5 {offsets = [8, 0], sizes = [8, 256], strides = [1, 1]} : vector<64x256xf32> to vector<8x256xf32>
    %cst_13 = arith.constant dense<0.000000e+00> : vector<8x256xf32>
    %36 = tpu.matmul %33, %6, %cst_13 {dimension_numbers = #tpu.dot_dimension_numbers<[1], [0], [0], [1], [0, 0, 1, 1], [], []>} : vector<8x64xf32>, vector<64x256xf32>, vector<8x256xf32> -> vector<8x256xf32>
    %37 = arith.addf %35, %36 : vector<8x256xf32>
    %38 = arith.negf %37 : vector<8x256xf32>
    %39 = math.exp %38 : vector<8x256xf32>
    %cst_14 = arith.constant 1.000000e+00 : f32
    %40 = vector.broadcast %cst_14 : f32 to vector<8x256xf32>
    %41 = arith.addf %40, %39 : vector<8x256xf32>
    %42 = arith.divf %40, %41 : vector<8x256xf32>
    %43 = math.tanh %37 : vector<8x256xf32>
    %44 = vector.extract_strided_slice %42 {offsets = [0, 0], sizes = [8, 64], strides = [1, 1]} : vector<8x256xf32> to vector<8x64xf32>
    %45 = vector.extract_strided_slice %42 {offsets = [0, 64], sizes = [8, 64], strides = [1, 1]} : vector<8x256xf32> to vector<8x64xf32>
    %46 = vector.extract_strided_slice %43 {offsets = [0, 128], sizes = [8, 64], strides = [1, 1]} : vector<8x256xf32> to vector<8x64xf32>
    %47 = vector.extract_strided_slice %42 {offsets = [0, 192], sizes = [8, 64], strides = [1, 1]} : vector<8x256xf32> to vector<8x64xf32>
    %48 = arith.mulf %45, %34 : vector<8x64xf32>
    %49 = arith.mulf %44, %46 : vector<8x64xf32>
    %50 = arith.addf %48, %49 : vector<8x64xf32>
    %51 = math.tanh %50 : vector<8x64xf32>
    %52 = arith.mulf %47, %51 : vector<8x64xf32>
    %53 = vector.extract_strided_slice %5 {offsets = [16, 0], sizes = [8, 256], strides = [1, 1]} : vector<64x256xf32> to vector<8x256xf32>
    %cst_15 = arith.constant dense<0.000000e+00> : vector<8x256xf32>
    %54 = tpu.matmul %52, %6, %cst_15 {dimension_numbers = #tpu.dot_dimension_numbers<[1], [0], [0], [1], [0, 0, 1, 1], [], []>} : vector<8x64xf32>, vector<64x256xf32>, vector<8x256xf32> -> vector<8x256xf32>
    %55 = arith.addf %53, %54 : vector<8x256xf32>
    %56 = arith.negf %55 : vector<8x256xf32>
    %57 = math.exp %56 : vector<8x256xf32>
    %cst_16 = arith.constant 1.000000e+00 : f32
    %58 = vector.broadcast %cst_16 : f32 to vector<8x256xf32>
    %59 = arith.addf %58, %57 : vector<8x256xf32>
    %60 = arith.divf %58, %59 : vector<8x256xf32>
    %61 = math.tanh %55 : vector<8x256xf32>
    %62 = vector.extract_strided_slice %60 {offsets = [0, 0], sizes = [8, 64], strides = [1, 1]} : vector<8x256xf32> to vector<8x64xf32>
    %63 = vector.extract_strided_slice %60 {offsets = [0, 64], sizes = [8, 64], strides = [1, 1]} : vector<8x256xf32> to vector<8x64xf32>
    %64 = vector.extract_strided_slice %61 {offsets = [0, 128], sizes = [8, 64], strides = [1, 1]} : vector<8x256xf32> to vector<8x64xf32>
    %65 = vector.extract_strided_slice %60 {offsets = [0, 192], sizes = [8, 64], strides = [1, 1]} : vector<8x256xf32> to vector<8x64xf32>
    %66 = arith.mulf %63, %50 : vector<8x64xf32>
    %67 = arith.mulf %62, %64 : vector<8x64xf32>
    %68 = arith.addf %66, %67 : vector<8x64xf32>
    %69 = math.tanh %68 : vector<8x64xf32>
    %70 = arith.mulf %65, %69 : vector<8x64xf32>
    %71 = vector.extract_strided_slice %5 {offsets = [24, 0], sizes = [8, 256], strides = [1, 1]} : vector<64x256xf32> to vector<8x256xf32>
    %cst_17 = arith.constant dense<0.000000e+00> : vector<8x256xf32>
    %72 = tpu.matmul %70, %6, %cst_17 {dimension_numbers = #tpu.dot_dimension_numbers<[1], [0], [0], [1], [0, 0, 1, 1], [], []>} : vector<8x64xf32>, vector<64x256xf32>, vector<8x256xf32> -> vector<8x256xf32>
    %73 = arith.addf %71, %72 : vector<8x256xf32>
    %74 = arith.negf %73 : vector<8x256xf32>
    %75 = math.exp %74 : vector<8x256xf32>
    %cst_18 = arith.constant 1.000000e+00 : f32
    %76 = vector.broadcast %cst_18 : f32 to vector<8x256xf32>
    %77 = arith.addf %76, %75 : vector<8x256xf32>
    %78 = arith.divf %76, %77 : vector<8x256xf32>
    %79 = math.tanh %73 : vector<8x256xf32>
    %80 = vector.extract_strided_slice %78 {offsets = [0, 0], sizes = [8, 64], strides = [1, 1]} : vector<8x256xf32> to vector<8x64xf32>
    %81 = vector.extract_strided_slice %78 {offsets = [0, 64], sizes = [8, 64], strides = [1, 1]} : vector<8x256xf32> to vector<8x64xf32>
    %82 = vector.extract_strided_slice %79 {offsets = [0, 128], sizes = [8, 64], strides = [1, 1]} : vector<8x256xf32> to vector<8x64xf32>
    %83 = vector.extract_strided_slice %78 {offsets = [0, 192], sizes = [8, 64], strides = [1, 1]} : vector<8x256xf32> to vector<8x64xf32>
    %84 = arith.mulf %81, %68 : vector<8x64xf32>
    %85 = arith.mulf %80, %82 : vector<8x64xf32>
    %86 = arith.addf %84, %85 : vector<8x64xf32>
    %87 = math.tanh %86 : vector<8x64xf32>
    %88 = arith.mulf %83, %87 : vector<8x64xf32>
    %89 = vector.extract_strided_slice %5 {offsets = [32, 0], sizes = [8, 256], strides = [1, 1]} : vector<64x256xf32> to vector<8x256xf32>
    %cst_19 = arith.constant dense<0.000000e+00> : vector<8x256xf32>
    %90 = tpu.matmul %88, %6, %cst_19 {dimension_numbers = #tpu.dot_dimension_numbers<[1], [0], [0], [1], [0, 0, 1, 1], [], []>} : vector<8x64xf32>, vector<64x256xf32>, vector<8x256xf32> -> vector<8x256xf32>
    %91 = arith.addf %89, %90 : vector<8x256xf32>
    %92 = arith.negf %91 : vector<8x256xf32>
    %93 = math.exp %92 : vector<8x256xf32>
    %cst_20 = arith.constant 1.000000e+00 : f32
    %94 = vector.broadcast %cst_20 : f32 to vector<8x256xf32>
    %95 = arith.addf %94, %93 : vector<8x256xf32>
    %96 = arith.divf %94, %95 : vector<8x256xf32>
    %97 = math.tanh %91 : vector<8x256xf32>
    %98 = vector.extract_strided_slice %96 {offsets = [0, 0], sizes = [8, 64], strides = [1, 1]} : vector<8x256xf32> to vector<8x64xf32>
    %99 = vector.extract_strided_slice %96 {offsets = [0, 64], sizes = [8, 64], strides = [1, 1]} : vector<8x256xf32> to vector<8x64xf32>
    %100 = vector.extract_strided_slice %97 {offsets = [0, 128], sizes = [8, 64], strides = [1, 1]} : vector<8x256xf32> to vector<8x64xf32>
    %101 = vector.extract_strided_slice %96 {offsets = [0, 192], sizes = [8, 64], strides = [1, 1]} : vector<8x256xf32> to vector<8x64xf32>
    %102 = arith.mulf %99, %86 : vector<8x64xf32>
    %103 = arith.mulf %98, %100 : vector<8x64xf32>
    %104 = arith.addf %102, %103 : vector<8x64xf32>
    %105 = math.tanh %104 : vector<8x64xf32>
    %106 = arith.mulf %101, %105 : vector<8x64xf32>
    %107 = vector.extract_strided_slice %5 {offsets = [40, 0], sizes = [8, 256], strides = [1, 1]} : vector<64x256xf32> to vector<8x256xf32>
    %cst_21 = arith.constant dense<0.000000e+00> : vector<8x256xf32>
    %108 = tpu.matmul %106, %6, %cst_21 {dimension_numbers = #tpu.dot_dimension_numbers<[1], [0], [0], [1], [0, 0, 1, 1], [], []>} : vector<8x64xf32>, vector<64x256xf32>, vector<8x256xf32> -> vector<8x256xf32>
    %109 = arith.addf %107, %108 : vector<8x256xf32>
    %110 = arith.negf %109 : vector<8x256xf32>
    %111 = math.exp %110 : vector<8x256xf32>
    %cst_22 = arith.constant 1.000000e+00 : f32
    %112 = vector.broadcast %cst_22 : f32 to vector<8x256xf32>
    %113 = arith.addf %112, %111 : vector<8x256xf32>
    %114 = arith.divf %112, %113 : vector<8x256xf32>
    %115 = math.tanh %109 : vector<8x256xf32>
    %116 = vector.extract_strided_slice %114 {offsets = [0, 0], sizes = [8, 64], strides = [1, 1]} : vector<8x256xf32> to vector<8x64xf32>
    %117 = vector.extract_strided_slice %114 {offsets = [0, 64], sizes = [8, 64], strides = [1, 1]} : vector<8x256xf32> to vector<8x64xf32>
    %118 = vector.extract_strided_slice %115 {offsets = [0, 128], sizes = [8, 64], strides = [1, 1]} : vector<8x256xf32> to vector<8x64xf32>
    %119 = vector.extract_strided_slice %114 {offsets = [0, 192], sizes = [8, 64], strides = [1, 1]} : vector<8x256xf32> to vector<8x64xf32>
    %120 = arith.mulf %117, %104 : vector<8x64xf32>
    %121 = arith.mulf %116, %118 : vector<8x64xf32>
    %122 = arith.addf %120, %121 : vector<8x64xf32>
    %123 = math.tanh %122 : vector<8x64xf32>
    %124 = arith.mulf %119, %123 : vector<8x64xf32>
    %125 = vector.extract_strided_slice %5 {offsets = [48, 0], sizes = [8, 256], strides = [1, 1]} : vector<64x256xf32> to vector<8x256xf32>
    %cst_23 = arith.constant dense<0.000000e+00> : vector<8x256xf32>
    %126 = tpu.matmul %124, %6, %cst_23 {dimension_numbers = #tpu.dot_dimension_numbers<[1], [0], [0], [1], [0, 0, 1, 1], [], []>} : vector<8x64xf32>, vector<64x256xf32>, vector<8x256xf32> -> vector<8x256xf32>
    %127 = arith.addf %125, %126 : vector<8x256xf32>
    %128 = arith.negf %127 : vector<8x256xf32>
    %129 = math.exp %128 : vector<8x256xf32>
    %cst_24 = arith.constant 1.000000e+00 : f32
    %130 = vector.broadcast %cst_24 : f32 to vector<8x256xf32>
    %131 = arith.addf %130, %129 : vector<8x256xf32>
    %132 = arith.divf %130, %131 : vector<8x256xf32>
    %133 = math.tanh %127 : vector<8x256xf32>
    %134 = vector.extract_strided_slice %132 {offsets = [0, 0], sizes = [8, 64], strides = [1, 1]} : vector<8x256xf32> to vector<8x64xf32>
    %135 = vector.extract_strided_slice %132 {offsets = [0, 64], sizes = [8, 64], strides = [1, 1]} : vector<8x256xf32> to vector<8x64xf32>
    %136 = vector.extract_strided_slice %133 {offsets = [0, 128], sizes = [8, 64], strides = [1, 1]} : vector<8x256xf32> to vector<8x64xf32>
    %137 = vector.extract_strided_slice %132 {offsets = [0, 192], sizes = [8, 64], strides = [1, 1]} : vector<8x256xf32> to vector<8x64xf32>
    %138 = arith.mulf %135, %122 : vector<8x64xf32>
    %139 = arith.mulf %134, %136 : vector<8x64xf32>
    %140 = arith.addf %138, %139 : vector<8x64xf32>
    %141 = math.tanh %140 : vector<8x64xf32>
    %142 = arith.mulf %137, %141 : vector<8x64xf32>
    %143 = vector.extract_strided_slice %5 {offsets = [56, 0], sizes = [8, 256], strides = [1, 1]} : vector<64x256xf32> to vector<8x256xf32>
    %cst_25 = arith.constant dense<0.000000e+00> : vector<8x256xf32>
    %144 = tpu.matmul %142, %6, %cst_25 {dimension_numbers = #tpu.dot_dimension_numbers<[1], [0], [0], [1], [0, 0, 1, 1], [], []>} : vector<8x64xf32>, vector<64x256xf32>, vector<8x256xf32> -> vector<8x256xf32>
    %145 = arith.addf %143, %144 : vector<8x256xf32>
    %146 = arith.negf %145 : vector<8x256xf32>
    %147 = math.exp %146 : vector<8x256xf32>
    %cst_26 = arith.constant 1.000000e+00 : f32
    %148 = vector.broadcast %cst_26 : f32 to vector<8x256xf32>
    %149 = arith.addf %148, %147 : vector<8x256xf32>
    %150 = arith.divf %148, %149 : vector<8x256xf32>
    %151 = math.tanh %145 : vector<8x256xf32>
    %152 = vector.extract_strided_slice %150 {offsets = [0, 0], sizes = [8, 64], strides = [1, 1]} : vector<8x256xf32> to vector<8x64xf32>
    %153 = vector.extract_strided_slice %150 {offsets = [0, 64], sizes = [8, 64], strides = [1, 1]} : vector<8x256xf32> to vector<8x64xf32>
    %154 = vector.extract_strided_slice %151 {offsets = [0, 128], sizes = [8, 64], strides = [1, 1]} : vector<8x256xf32> to vector<8x64xf32>
    %155 = vector.extract_strided_slice %150 {offsets = [0, 192], sizes = [8, 64], strides = [1, 1]} : vector<8x256xf32> to vector<8x64xf32>
    %156 = arith.mulf %153, %140 : vector<8x64xf32>
    %157 = arith.mulf %152, %154 : vector<8x64xf32>
    %158 = arith.addf %156, %157 : vector<8x64xf32>
    %159 = math.tanh %158 : vector<8x64xf32>
    %160 = arith.mulf %155, %159 : vector<8x64xf32>
    %161 = vector.extract_strided_slice %5 {offsets = [56, 0], sizes = [8, 256], strides = [1, 1]} : vector<64x256xf32> to vector<8x256xf32>
    %cst_27 = arith.constant dense<0.000000e+00> : vector<8x256xf32>
    %162 = tpu.matmul %160, %6, %cst_27 {dimension_numbers = #tpu.dot_dimension_numbers<[1], [0], [0], [1], [0, 0, 1, 1], [], []>} : vector<8x64xf32>, vector<64x256xf32>, vector<8x256xf32> -> vector<8x256xf32>
    %163 = arith.addf %161, %162 : vector<8x256xf32>
    %164 = arith.negf %163 : vector<8x256xf32>
    %165 = math.exp %164 : vector<8x256xf32>
    %cst_28 = arith.constant 1.000000e+00 : f32
    %166 = vector.broadcast %cst_28 : f32 to vector<8x256xf32>
    %167 = arith.addf %166, %165 : vector<8x256xf32>
    %168 = arith.divf %166, %167 : vector<8x256xf32>
    %169 = math.tanh %163 : vector<8x256xf32>
    %170 = vector.extract_strided_slice %168 {offsets = [0, 0], sizes = [8, 64], strides = [1, 1]} : vector<8x256xf32> to vector<8x64xf32>
    %171 = vector.extract_strided_slice %168 {offsets = [0, 64], sizes = [8, 64], strides = [1, 1]} : vector<8x256xf32> to vector<8x64xf32>
    %172 = vector.extract_strided_slice %169 {offsets = [0, 128], sizes = [8, 64], strides = [1, 1]} : vector<8x256xf32> to vector<8x64xf32>
    %173 = vector.extract_strided_slice %168 {offsets = [0, 192], sizes = [8, 64], strides = [1, 1]} : vector<8x256xf32> to vector<8x64xf32>
    %174 = arith.mulf %171, %158 : vector<8x64xf32>
    %175 = arith.mulf %170, %172 : vector<8x64xf32>
    %176 = arith.addf %174, %175 : vector<8x64xf32>
    %177 = math.tanh %176 : vector<8x64xf32>
    %178 = arith.mulf %173, %177 : vector<8x64xf32>
    %c32_i32_29 = arith.constant 32 : i32
    %179 = vector.broadcast %c32_i32_29 : i32 to vector<8x64xi32>
    %180 = arith.cmpi sge, %9, %179 : vector<8x64xi32>
    %c64_i32 = arith.constant 64 : i32
    %181 = vector.broadcast %c64_i32 : i32 to vector<8x64xi32>
    %182 = arith.cmpi slt, %9, %181 : vector<8x64xi32>
    %183 = arith.andi %180, %182 : vector<8x64xi1>
    %184 = arith.select %183, %178, %160 : vector<8x64xi1>, vector<8x64xf32>
    %185 = arith.select %183, %176, %158 : vector<8x64xi1>, vector<8x64xf32>
    %186 = tpu.concatenate %52, %70, %88, %106, %124, %142, %160, %184 in 1 : vector<8x64xf32>, vector<8x64xf32>, vector<8x64xf32>, vector<8x64xf32>, vector<8x64xf32>, vector<8x64xf32>, vector<8x64xf32>, vector<8x64xf32> -> vector<8x512xf32>
    %c0_30 = arith.constant 0 : index
    %c0_31 = arith.constant 0 : index
    %187 = vector.load %arg7[%c0_30, %c0_31] : memref<8x512xf32, #tpu.memory_space<vmem>>, vector<8x512xf32>
    tpu.vector_store %arg7[%c0_30, %c0_31], %186 {strides = array<i32>} : memref<8x512xf32, #tpu.memory_space<vmem>>, vector<8x512xf32>,
    %188 = tpu.concatenate %184, %185 in 1 : vector<8x64xf32>, vector<8x64xf32> -> vector<8x128xf32>
    %c0_32 = arith.constant 0 : index
    %c0_33 = arith.constant 0 : index
    %189 = vector.load %arg8[%c0_32, %c0_33] : memref<8x128xf32, #tpu.memory_space<vmem>>, vector<8x128xf32>
    tpu.vector_store %arg8[%c0_32, %c0_33], %188 {strides = array<i32>} : memref<8x128xf32, #tpu.memory_space<vmem>>, vector<8x128xf32>,
    return
  }
  func.func @transform_0(%arg0: i32) -> (i32, i32) {
    %c0_i32 = arith.constant 0 : i32
    %c0_i32_0 = arith.constant 0 : i32
    %c0_i32_1 = arith.constant 0 : i32
    return %c0_i32, %c0_i32_0 : i32, i32
  }
  func.func @transform_1(%arg0: i32) -> (i32, i32) {
    %c0_i32 = arith.constant 0 : i32
    %c0_i32_0 = arith.constant 0 : i32
    %c0_i32_1 = arith.constant 0 : i32
    return %c0_i32, %c0_i32_0 : i32, i32
  }
  func.func @transform_2(%arg0: i32) -> (i32, i32) {
    %c0_i32 = arith.constant 0 : i32
    %c0_i32_0 = arith.constant 0 : i32
    %c0_i32_1 = arith.constant 0 : i32
    return %c0_i32, %c0_i32_0 : i32, i32
  }
  func.func @transform_3(%arg0: i32) -> (i32, i32) {
    %c0_i32 = arith.constant 0 : i32
    %c0_i32_0 = arith.constant 0 : i32
    %c0_i32_1 = arith.constant 0 : i32
    return %c0_i32, %c0_i32_0 : i32, i32
  }
  func.func @transform_4(%arg0: i32) -> (i32, i32) {
    %c0_i32 = arith.constant 0 : i32
    %c0_i32_0 = arith.constant 0 : i32
    %c0_i32_1 = arith.constant 0 : i32
    return %c0_i32, %c0_i32_0 : i32, i32
  }
  func.func @transform_5(%arg0: i32) -> (i32, i32) {
    %c0_i32 = arith.constant 0 : i32
    %c0_i32_0 = arith.constant 0 : i32
    %c0_i32_1 = arith.constant 0 : i32
    return %c0_i32, %c0_i32_0 : i32, i32
  }
  func.func @transform_6(%arg0: i32) -> (i32, i32) {
    %c0_i32 = arith.constant 0 : i32
    %c0_i32_0 = arith.constant 0 : i32
    %c0_i32_1 = arith.constant 0 : i32
    return %c0_i32, %c0_i32_0 : i32, i32
  }
  func.func @transform_7(%arg0: i32) -> (i32, i32) {
    %c0_i32 = arith.constant 0 : i32
    %c0_i32_0 = arith.constant 0 : i32
    %c0_i32_1 = arith.constant 0 : i32
    return %c0_i32, %c0_i32_0 : i32, i32
  }
}

</mosaic_0001>

<llo_original>
// kernel: tpu_custom_call.1
$region0: #{tpu_custom_call.1}
  #allocation0 [shape = 'u32[]', space=smem, size = 0x4, offset = 0x4, fixed_abs, tag = 'smem constant byte address 0x4 - core index']
  #allocation1 [shape = 'u32[144,128]{1,0:T(1,128)}', space=vmem, size = 0x12000, scoped, tag = 'internal scratch']
  %s0 = inlined_call_operand.vmem [shape: f32[64,32], index: 0, kind: input, shape index: {}]
  %s1 = inlined_call_operand.vmem [shape: f32[32,256], index: 1, kind: input, shape index: {}]
  %s2 = inlined_call_operand.hbm [shape: f32[64,256], index: 2, kind: input, shape index: {}]
  %s3 = inlined_call_operand.vmem [shape: f32[1,256], index: 3, kind: input, shape index: {}]
  %s4 = inlined_call_operand.vmem [shape: f32[8,64], index: 4, kind: input, shape index: {}]
  %s5 = inlined_call_operand.vmem [shape: f32[8,64], index: 5, kind: input, shape index: {}]
  %s6 = inlined_call_operand.hbm [shape: f32[8,512], index: 6, kind: output, shape index: {0}]
  %s7 = inlined_call_operand.hbm [shape: f32[8,128], index: 7, kind: output, shape index: {1}]
  %8 = xla_tuple %s6, %s7
  %s9 = sld [smem:[#allocation0]]
  $region46: #{tpu_custom_call.1} parent=0
    _
  %s11 = ssub.s32 1, %s9
  %s12 = scalar_select 0, %s11, %s9
  $region1: #{tpu_custom_call.1} parent=0
    #allocation2 [shape = 'u8[65536]{0}', space=vmem, size = 0x10000, scoped, tag = 'input window, operand 2, single buffered']
    #allocation3 [shape = 's32[1]{0}', space=sflag, size = 0x4, scoped, tag = 'scoped memory for tpu_custom_call.1']
    #allocation4 [shape = 's32[1]{0}', space=sflag, size = 0x4, scoped, tag = 'scoped memory for tpu_custom_call.1']
    #allocation5 [shape = 'u8[16384]{0}', space=vmem, size = 0x4000, scoped, tag = 'output window, operand 0, single buffered']
    #allocation6 [shape = 'u8[4096]{0}', space=vmem, size = 0x1000, scoped, tag = 'output window, operand 1, single buffered']
    #allocation7 [shape = 's32[1]{0}', space=sflag, size = 0x4, scoped, tag = 'scoped memory for tpu_custom_call.1']
    %13 = vsyncpa [#allocation3], 0
    %14 = vsyncpa [#allocation4], 0
    %15 = vsyncpa [#allocation7], 0
    // Predicated region
    $region2: #{tpu_custom_call.1} parent=1 // pred_check
      _
    $region3: #{tpu_custom_call.1} parent=1 // pred_check_branch
      %17 = sbr.rel (0) target = $region5
    $region4: #{tpu_custom_call.1} parent=1 // pred_region
      _
    $region5: #{tpu_custom_call.1} parent=1 // pred_fallthru
      _
    // Predicated region
    $region6: #{tpu_custom_call.1} parent=1 // pred_check
      _
    $region7: #{tpu_custom_call.1} parent=1 // pred_check_branch
      %19 = sbr.rel (0) target = $region9
    $region8: #{tpu_custom_call.1} parent=1 // pred_region
      _
    $region9: #{tpu_custom_call.1} parent=1 // pred_fallthru
      _
    // Predicated region
    $region10: #{tpu_custom_call.1} parent=1 // pred_check
      _
    $region11: #{tpu_custom_call.1} parent=1 // pred_check_branch
      %21 = sbr.rel (0) target = $region13
    $region12: #{tpu_custom_call.1} parent=1 // pred_region
      %s23 = ssub.s32 2048, 2048
      %24 = vsyncadd [#allocation3], %s23
      %s25 = sshll.u32 [#allocation2], 4
      %s26 = int_to_ptr.vmem [resolvable:$true] %s25
      %31 = dma.hbm_to_vmem [thread:$0]  %s2, 2048, %s26, [#allocation3], 256, 256, 16
    $region13: #{tpu_custom_call.1} parent=1 // pred_fallthru
      _
    // Predicated region
    $region14: #{tpu_custom_call.1} parent=1 // pred_check
      _
    $region15: #{tpu_custom_call.1} parent=1 // pred_check_branch
      %33 = sbr.rel (0) target = $region17
    $region16: #{tpu_custom_call.1} parent=1 // pred_region
      _
    $region17: #{tpu_custom_call.1} parent=1 // pred_fallthru
      _
    // Predicated region
    $region18: #{tpu_custom_call.1} parent=1 // pred_check
      _
    $region19: #{tpu_custom_call.1} parent=1 // pred_check_branch
      %35 = sbr.rel (0) target = $region21
    $region20: #{tpu_custom_call.1} parent=1 // pred_region
      _
    $region21: #{tpu_custom_call.1} parent=1 // pred_fallthru
      _
    // Predicated region
    $region22: #{tpu_custom_call.1} parent=1 // pred_check
      _
    $region23: #{tpu_custom_call.1} parent=1 // pred_check_branch
      %37 = sbr.rel (0) target = $region25
    $region24: #{tpu_custom_call.1} parent=1 // pred_region
      _
    $region25: #{tpu_custom_call.1} parent=1 // pred_fallthru
      _
    // Predicated region
    $region26: #{tpu_custom_call.1} parent=1 // pred_check
      _
    $region27: #{tpu_custom_call.1} parent=1 // pred_check_branch
      %39 = sbr.rel (0) target = $region29
    $region28: #{tpu_custom_call.1} parent=1 // pred_region
      %40 = dma.done [#allocation3], 2048
    $region29: #{tpu_custom_call.1} parent=1 // pred_fallthru
      _
    %v41 = vld [vmem:[%s0] sm:$0xff]
    %v42 = vld [vmem:[%s0 + $0x8] sm:$0xff]
    %v43 = vld [vmem:[%s0 + $0x10] sm:$0xff]
    %v44 = vld [vmem:[%s0 + $0x18] sm:$0xff]
    %v45 = vld [vmem:[%s0 + $0x20] sm:$0xff]
    %v46 = vld [vmem:[%s0 + $0x28] sm:$0xff]
    %v47 = vld [vmem:[%s0 + $0x30] sm:$0xff]
    %v48 = vld [vmem:[%s0 + $0x38] sm:$0xff]
    %v49 = vld [vmem:[%s1] sm:$0xff]
    %v50 = vld [vmem:[%s1 + $0x8] sm:$0xff]
    %v51 = vld [vmem:[%s1 + $0x10] sm:$0xff]
    %v52 = vld [vmem:[%s1 + $0x18] sm:$0xff]
    %v53 = vld [vmem:[%s1 + $0x20] sm:$0xff]
    %v54 = vld [vmem:[%s1 + $0x28] sm:$0xff]
    %v55 = vld [vmem:[%s1 + $0x30] sm:$0xff]
    %v56 = vld [vmem:[%s1 + $0x38] sm:$0xff]
    %v57 = vld [vmem:[%s3] sm:$0x3]
    %v59 = vlaneseq
    %v60 = vshrl.u32 %v59, 7
    %v61 = vsub.s32 0, %v60
    %v62 = vrot.slane %v57, %v61
    %v63 = vlaneseq
    %v64 = vshrl.u32 %v63, 7
    %v65 = vsub.s32 1, %v64
    %v66 = vrot.slane %v57, %v65
    %vm69 = vcmask 261120
    %v71 = vsel %vm69, %v41, 0
    %v74 = vsel %vm69, %v42, 0
    %v77 = vsel %vm69, %v43, 0
    %v80 = vsel %vm69, %v44, 0
    %v83 = vsel %vm69, %v45, 0
    %v86 = vsel %vm69, %v46, 0
    %v89 = vsel %vm69, %v47, 0
    %v92 = vsel %vm69, %v48, 0
    %94 = vmatprep.subr.mxu0 %v50
    %95 = vmatpush1.msra.mxu0 %v49
    %96 = vmatprep.subr.mxu0 %v52
    %97 = vmatpush1.msra.mxu0 %v51
    %98 = vmatprep.subr.mxu0 %v54
    %99 = vmatpush1.msra.mxu0 %v53
    %100 = vmatprep.subr.mxu0 %v56
    %101 = vmatpush1.msra.mxu0 %v55
    %102 = vmatprep.subr.mxu0 0.0
    %103 = vmatpush1.msra.mxu0 0.0
    %104 = vmatprep.subr.mxu0 0.0
    %105 = vmatpush1.msra.mxu0 0.0
    %106 = vmatprep.subr.mxu0 0.0
    %107 = vmatpush1.msra.mxu0 0.0
    %108 = vmatprep.subr.mxu0 0.0
    %109 = vmatpush1.msra.mxu0 0.0
    %110 = vmatprep.subr.mxu0 0.0
    %111 = vmatpush1.msra.mxu0 0.0
    %112 = vmatprep.subr.mxu0 0.0
    %113 = vmatpush1.msra.mxu0 0.0
    %114 = vmatprep.subr.mxu0 0.0
    %115 = vmatpush1.msra.mxu0 0.0
    %116 = vmatprep.subr.mxu0 0.0
    %117 = vmatpush1.msra.mxu0 0.0
    %118 = vmatprep.subr.mxu0 0.0
    %119 = vmatpush1.msra.mxu0 0.0
    %120 = vmatprep.subr.mxu0 0.0
    %121 = vmatpush1.msra.mxu0 0.0
    %122 = vmatprep.subr.mxu0 0.0
    %123 = vmatpush1.msra.mxu0 0.0
    %124 = vmatprep.subr.mxu0 0.0
    %125 = vmatpush1.msra.mxu0 0.0
    %126 = vmatprep.subr.mxu0 0.0
    %127 = vmatpush1.msra.mxu0 0.0
    %128 = vmatprep.subr.mxu0 0.0
    %129 = vmatpush1.msra.mxu0 0.0
    %130 = vmatprep.subr.mxu0 0.0
    %131 = vmatpush1.msra.mxu0 0.0
    %132 = vmatprep.subr.mxu0 0.0
    %133 = vmatpush1.msra.mxu0 0.0
    %134 = vmatprep.subr.mxu0 0.0
    %135 = vmatpush1.msra.mxu0 0.0
    %136 = vmatprep.subr.mxu0 0.0
    %137 = vmatpush1.msra.mxu0 0.0
    %138 = vmatprep.subr.mxu0 0.0
    %139 = vmatpush1.msra.mxu0 0.0
    %140 = vmatprep.subr.mxu0 0.0
    %141 = vmatpush1.msra.mxu0 0.0
    %142 = vmatprep.subr.mxu0 0.0
    %143 = vmatpush1.msra.mxu0 0.0
    %144 = vmatprep.subr.mxu0 0.0
    %145 = vmatpush1.msra.mxu0 0.0
    %146 = vmatprep.subr.mxu0 0.0
    %147 = vmatpush1.msra.mxu0 0.0
    %148 = vmatprep.subr.mxu0 0.0
    %149 = vmatpush1.msra.mxu0 0.0
    %150 = vmatprep.subr.mxu0 0.0
    %151 = vmatpush1.msra.mxu0 0.0
    %152 = vmatprep.subr.mxu0 0.0
    %153 = vmatpush1.msra.mxu0 0.0
    %154 = vmatprep.subr.mxu0 0.0
    %155 = vmatpush1.msra.mxu0 0.0
    %156 = vmatprep.subr.mxu0 0.0
    %157 = vmatpush1.msra.mxu0 0.0
    %158 = vmatprep.mubr.f32.mxu0 0.0
    %159 = vmatmul.mubr.f32.gmra.mrb[0].mxu0 %v71
    %v160 = vpop.f32.mrb[0].mxu0
    %v161 = vadd.f32 %v62, %v160
    %v162 = vpop.f32.mrb[0].mxu0
    %v163 = vadd.f32 %v66, %v162
    %164 = vmatprep.mubr.f32.mxu0 0.0
    %165 = vmatmul.mubr.f32.gmra.mrb[0].mxu0 %v74
    %v166 = vpop.f32.mrb[0].mxu0
    %v167 = vadd.f32 %v62, %v166
    %v168 = vpop.f32.mrb[0].mxu0
    %v169 = vadd.f32 %v66, %v168
    %170 = vmatprep.mubr.f32.mxu0 0.0
    %171 = vmatmul.mubr.f32.gmra.mrb[0].mxu0 %v77
    %v172 = vpop.f32.mrb[0].mxu0
    %v173 = vadd.f32 %v62, %v172
    %v174 = vpop.f32.mrb[0].mxu0
    %v175 = vadd.f32 %v66, %v174
    %176 = vmatprep.mubr.f32.mxu0 0.0
    %177 = vmatmul.mubr.f32.gmra.mrb[0].mxu0 %v80
    %v178 = vpop.f32.mrb[0].mxu0
    %v179 = vadd.f32 %v62, %v178
    %v180 = vpop.f32.mrb[0].mxu0
    %v181 = vadd.f32 %v66, %v180
    %182 = vmatprep.mubr.f32.mxu0 0.0
    %183 = vmatmul.mubr.f32.gmra.mrb[0].mxu0 %v83
    %v184 = vpop.f32.mrb[0].mxu0
    %v185 = vadd.f32 %v62, %v184
    %v186 = vpop.f32.mrb[0].mxu0
    %v187 = vadd.f32 %v66, %v186
    %188 = vmatprep.mubr.f32.mxu0 0.0
    %189 = vmatmul.mubr.f32.gmra.mrb[0].mxu0 %v86
    %v190 = vpop.f32.mrb[0].mxu0
    %v191 = vadd.f32 %v62, %v190
    %v192 = vpop.f32.mrb[0].mxu0
    %v193 = vadd.f32 %v66, %v192
    %194 = vmatprep.mubr.f32.mxu0 0.0
    %195 = vmatmul.mubr.f32.gmra.mrb[0].mxu0 %v89
    %v196 = vpop.f32.mrb[0].mxu0
    %v197 = vadd.f32 %v62, %v196
    %v198 = vpop.f32.mrb[0].mxu0
    %v199 = vadd.f32 %v66, %v198
    %200 = vmatprep.mubr.f32.mxu0 0.0
    %201 = vmatmul.mubr.f32.gmra.mrb[0].mxu0 %v92
    %v202 = vpop.f32.mrb[0].mxu0
    %v203 = vadd.f32 %v62, %v202
    %v204 = vpop.f32.mrb[0].mxu0
    %v205 = vadd.f32 %v66, %v204
    %206 = vdwg.mxu0
    %v207 = vld [vmem:[#allocation2] sm:$0xff]
    %v208 = vld [vmem:[#allocation2 + $0x8] sm:$0xff]
    %v209 = vld [vmem:[#allocation2 + $0x10] sm:$0xff]
    %v210 = vld [vmem:[#allocation2 + $0x18] sm:$0xff]
    %v211 = vld [vmem:[#allocation2 + $0x20] sm:$0xff]
    %v212 = vld [vmem:[#allocation2 + $0x28] sm:$0xff]
    %v213 = vld [vmem:[#allocation2 + $0x30] sm:$0xff]
    %v214 = vld [vmem:[#allocation2 + $0x38] sm:$0xff]
    %v215 = vld [vmem:[#allocation2 + $0x40] sm:$0xff]
    %v216 = vld [vmem:[#allocation2 + $0x48] sm:$0xff]
    %v217 = vld [vmem:[#allocation2 + $0x50] sm:$0xff]
    %v218 = vld [vmem:[#allocation2 + $0x58] sm:$0xff]
    %v219 = vld [vmem:[#allocation2 + $0x60] sm:$0xff]
    %v220 = vld [vmem:[#allocation2 + $0x68] sm:$0xff]
    %v221 = vld [vmem:[#allocation2 + $0x70] sm:$0xff]
    %v222 = vld [vmem:[#allocation2 + $0x78] sm:$0xff]
    %v223 = vld [vmem:[%s4] sm:$0xff]
    %v224 = vld [vmem:[%s5] sm:$0xff]
    %v225 = vlaneseq
    %v226 = vand.u32 %v225, 127
    %vm227 = vcmask 523264
    %v229 = vsel %vm227, %v223, 0
    %231 = vmatprep.subr.mxu0 %v208
    %232 = vmatpush1.msra.mxu0 %v207
    %233 = vmatprep.subr.mxu0 %v210
    %234 = vmatpush1.msra.mxu0 %v209
    %235 = vmatprep.subr.mxu0 %v212
    %236 = vmatpush1.msra.mxu0 %v211
    %237 = vmatprep.subr.mxu0 %v214
    %238 = vmatpush1.msra.mxu0 %v213
    %239 = vmatprep.subr.mxu0 %v216
    %240 = vmatpush1.msra.mxu0 %v215
    %241 = vmatprep.subr.mxu0 %v218
    %242 = vmatpush1.msra.mxu0 %v217
    %243 = vmatprep.subr.mxu0 %v220
    %244 = vmatpush1.msra.mxu0 %v219
    %245 = vmatprep.subr.mxu0 %v222
    %246 = vmatpush1.msra.mxu0 %v221
    %247 = vmatprep.subr.mxu0 0.0
    %248 = vmatpush1.msra.mxu0 0.0
    %249 = vmatprep.subr.mxu0 0.0
    %250 = vmatpush1.msra.mxu0 0.0
    %251 = vmatprep.subr.mxu0 0.0
    %252 = vmatpush1.msra.mxu0 0.0
    %253 = vmatprep.subr.mxu0 0.0
    %254 = vmatpush1.msra.mxu0 0.0
    %255 = vmatprep.subr.mxu0 0.0
    %256 = vmatpush1.msra.mxu0 0.0
    %257 = vmatprep.subr.mxu0 0.0
    %258 = vmatpush1.msra.mxu0 0.0
    %259 = vmatprep.subr.mxu0 0.0
    %260 = vmatpush1.msra.mxu0 0.0
    %261 = vmatprep.subr.mxu0 0.0
    %262 = vmatpush1.msra.mxu0 0.0
    %263 = vmatprep.subr.mxu0 0.0
    %264 = vmatpush1.msra.mxu0 0.0
    %265 = vmatprep.subr.mxu0 0.0
    %266 = vmatpush1.msra.mxu0 0.0
    %267 = vmatprep.subr.mxu0 0.0
    %268 = vmatpush1.msra.mxu0 0.0
    %269 = vmatprep.subr.mxu0 0.0
    %270 = vmatpush1.msra.mxu0 0.0
    %271 = vmatprep.subr.mxu0 0.0
    %272 = vmatpush1.msra.mxu0 0.0
    %273 = vmatprep.subr.mxu0 0.0
    %274 = vmatpush1.msra.mxu0 0.0
    %275 = vmatprep.subr.mxu0 0.0
    %276 = vmatpush1.msra.mxu0 0.0
    %277 = vmatprep.subr.mxu0 0.0
    %278 = vmatpush1.msra.mxu0 0.0
    %279 = vmatprep.subr.mxu0 0.0
    %280 = vmatpush1.msra.mxu0 0.0
    %281 = vmatprep.subr.mxu0 0.0
    %282 = vmatpush1.msra.mxu0 0.0
    %283 = vmatprep.subr.mxu0 0.0
    %284 = vmatpush1.msra.mxu0 0.0
    %285 = vmatprep.subr.mxu0 0.0
    %286 = vmatpush1.msra.mxu0 0.0
    %287 = vmatprep.subr.mxu0 0.0
    %288 = vmatpush1.msra.mxu0 0.0
    %289 = vmatprep.subr.mxu0 0.0
    %290 = vmatpush1.msra.mxu0 0.0
    %291 = vmatprep.subr.mxu0 0.0
    %292 = vmatpush1.msra.mxu0 0.0
    %293 = vmatprep.subr.mxu0 0.0
    %294 = vmatpush1.msra.mxu0 0.0
    %295 = vmatprep.mubr.f32.mxu0 0.0
    %296 = vmatmul.mubr.f32.gmra.mrb[0].mxu0 %v229
    %v297 = vpop.f32.mrb[0].mxu0
    %v298 = vadd.f32 0.0, %v297
    %v299 = vpop.f32.mrb[0].mxu0
    %v300 = vadd.f32 0.0, %v299
    %301 = vdwg.mxu0
    %v302 = vadd.f32 %v161, %v298
    %v303 = vadd.f32 %v163, %v300
    %v304 = vxor.u32 %v302, 2147483648
    %v305 = vxor.u32 %v303, 2147483648
    %v306 = vmul.f32 %v304, 1.442695
    %v307 = vpow.pop %v306
    %v308 = vmul.f32 %v305, 1.442695
    %v309 = vpow.pop %v308
    %v310 = vadd.f32 %v307, 1.0
    %v311 = vadd.f32 %v309, 1.0
    %v312 = vrcp.pop %v310
    %v313 = vmul.f32 1.0, %v312
    %v314 = vrcp.pop %v311
    %v315 = vmul.f32 1.0, %v314
    %v316 = vtanh.pop %v303
    %318 = vrot.lane.b32.xlu0 %v224, 64
    %v319 = vpop.permute.xlu0 %318
    %v321 = vmul.f32 %v313, %v319
    %v322 = vmul.f32 %v313, %v316
    %324 = vrot.lane.b32.xlu0 %v322, 64
    %v325 = vpop.permute.xlu0 %324
    %v327 = vadd.f32 %v321, %v325
    %v328 = vtanh.pop %v327
    %v329 = vmul.f32 %v315, %v328
    %vm330 = vcmp.ge.s32.totalorder %v226, 0
    %vm331 = vcmp.lt.s32.totalorder %v226, 32
    %vm332 = vmand %vm330, %vm331
    %334 = vrot.lane.b32.xlu0 %v329, 64
    %v335 = vpop.permute.xlu0 %334
    %v337 = vsel %vm332, %v335, %v223
    %339 = vrot.lane.b32.xlu0 %v327, 64
    %v340 = vpop.permute.xlu0 %339
    %v342 = vsel %vm332, %v340, %v224
    %v344 = vsel %vm227, %v337, 0
    %346 = vmatprep.subr.mxu0 %v208
    %347 = vmatpush1.msra.mxu0 %v207
    %348 = vmatprep.subr.mxu0 %v210
    %349 = vmatpush1.msra.mxu0 %v209
    %350 = vmatprep.subr.mxu0 %v212
    %351 = vmatpush1.msra.mxu0 %v211
    %352 = vmatprep.subr.mxu0 %v214
    %353 = vmatpush1.msra.mxu0 %v213
    %354 = vmatprep.subr.mxu0 %v216
    %355 = vmatpush1.msra.mxu0 %v215
    %356 = vmatprep.subr.mxu0 %v218
    %357 = vmatpush1.msra.mxu0 %v217
    %358 = vmatprep.subr.mxu0 %v220
    %359 = vmatpush1.msra.mxu0 %v219
    %360 = vmatprep.subr.mxu0 %v222
    %361 = vmatpush1.msra.mxu0 %v221
    %362 = vmatprep.subr.mxu0 0.0
    %363 = vmatpush1.msra.mxu0 0.0
    %364 = vmatprep.subr.mxu0 0.0
    %365 = vmatpush1.msra.mxu0 0.0
    %366 = vmatprep.subr.mxu0 0.0
    %367 = vmatpush1.msra.mxu0 0.0
    %368 = vmatprep.subr.mxu0 0.0
    %369 = vmatpush1.msra.mxu0 0.0
    %370 = vmatprep.subr.mxu0 0.0
    %371 = vmatpush1.msra.mxu0 0.0
    %372 = vmatprep.subr.mxu0 0.0
    %373 = vmatpush1.msra.mxu0 0.0
    %374 = vmatprep.subr.mxu0 0.0
    %375 = vmatpush1.msra.mxu0 0.0
    %376 = vmatprep.subr.mxu0 0.0
    %377 = vmatpush1.msra.mxu0 0.0
    %378 = vmatprep.subr.mxu0 0.0
    %379 = vmatpush1.msra.mxu0 0.0
    %380 = vmatprep.subr.mxu0 0.0
    %381 = vmatpush1.msra.mxu0 0.0
    %382 = vmatprep.subr.mxu0 0.0
    %383 = vmatpush1.msra.mxu0 0.0
    %384 = vmatprep.subr.mxu0 0.0
    %385 = vmatpush1.msra.mxu0 0.0
    %386 = vmatprep.subr.mxu0 0.0
    %387 = vmatpush1.msra.mxu0 0.0
    %388 = vmatprep.subr.mxu0 0.0
    %389 = vmatpush1.msra.mxu0 0.0
    %390 = vmatprep.subr.mxu0 0.0
    %391 = vmatpush1.msra.mxu0 0.0
    %392 = vmatprep.subr.mxu0 0.0
    %393 = vmatpush1.msra.mxu0 0.0
    %394 = vmatprep.subr.mxu0 0.0
    %395 = vmatpush1.msra.mxu0 0.0
    %396 = vmatprep.subr.mxu0 0.0
    %397 = vmatpush1.msra.mxu0 0.0
    %398 = vmatprep.subr.mxu0 0.0
    %399 = vmatpush1.msra.mxu0 0.0
    %400 = vmatprep.subr.mxu0 0.0
    %401 = vmatpush1.msra.mxu0 0.0
    %402 = vmatprep.subr.mxu0 0.0
    %403 = vmatpush1.msra.mxu0 0.0
    %404 = vmatprep.subr.mxu0 0.0
    %405 = vmatpush1.msra.mxu0 0.0
    %406 = vmatprep.subr.mxu0 0.0
    %407 = vmatpush1.msra.mxu0 0.0
    %408 = vmatprep.subr.mxu0 0.0
    %409 = vmatpush1.msra.mxu0 0.0
    %410 = vmatprep.mubr.f32.mxu0 0.0
    %411 = vmatmul.mubr.f32.gmra.mrb[0].mxu0 %v344
    %v412 = vpop.f32.mrb[0].mxu0
    %v413 = vadd.f32 0.0, %v412
    %v414 = vpop.f32.mrb[0].mxu0
    %v415 = vadd.f32 0.0, %v414
    %416 = vdwg.mxu0
    %v417 = vadd.f32 %v167, %v413
    %v418 = vadd.f32 %v169, %v415
    %v419 = vxor.u32 %v417, 2147483648
    %v420 = vxor.u32 %v418, 2147483648
    %v421 = vmul.f32 %v419, 1.442695
    %v422 = vpow.pop %v421
    %v423 = vmul.f32 %v420, 1.442695
    %v424 = vpow.pop %v423
    %v425 = vadd.f32 %v422, 1.0
    %v426 = vadd.f32 %v424, 1.0
    %v427 = vrcp.pop %v425
    %v428 = vmul.f32 1.0, %v427
    %v429 = vrcp.pop %v426
    %v430 = vmul.f32 1.0, %v429
    %v431 = vtanh.pop %v418
    %433 = vrot.lane.b32.xlu0 %v342, 64
    %v434 = vpop.permute.xlu0 %433
    %v436 = vmul.f32 %v428, %v434
    %v437 = vmul.f32 %v428, %v431
    %439 = vrot.lane.b32.xlu0 %v437, 64
    %v440 = vpop.permute.xlu0 %439
    %v442 = vadd.f32 %v436, %v440
    %v443 = vtanh.pop %v442
    %v444 = vmul.f32 %v430, %v443
    %446 = vrot.lane.b32.xlu0 %v444, 64
    %v447 = vpop.permute.xlu0 %446
    %v448 = vsel %vm227, %v447, 0
    %450 = vmatprep.subr.mxu0 %v208
    %451 = vmatpush1.msra.mxu0 %v207
    %452 = vmatprep.subr.mxu0 %v210
    %453 = vmatpush1.msra.mxu0 %v209
    %454 = vmatprep.subr.mxu0 %v212
    %455 = vmatpush1.msra.mxu0 %v211
    %456 = vmatprep.subr.mxu0 %v214
    %457 = vmatpush1.msra.mxu0 %v213
    %458 = vmatprep.subr.mxu0 %v216
    %459 = vmatpush1.msra.mxu0 %v215
    %460 = vmatprep.subr.mxu0 %v218
    %461 = vmatpush1.msra.mxu0 %v217
    %462 = vmatprep.subr.mxu0 %v220
    %463 = vmatpush1.msra.mxu0 %v219
    %464 = vmatprep.subr.mxu0 %v222
    %465 = vmatpush1.msra.mxu0 %v221
    %466 = vmatprep.subr.mxu0 0.0
    %467 = vmatpush1.msra.mxu0 0.0
    %468 = vmatprep.subr.mxu0 0.0
    %469 = vmatpush1.msra.mxu0 0.0
    %470 = vmatprep.subr.mxu0 0.0
    %471 = vmatpush1.msra.mxu0 0.0
    %472 = vmatprep.subr.mxu0 0.0
    %473 = vmatpush1.msra.mxu0 0.0
    %474 = vmatprep.subr.mxu0 0.0
    %475 = vmatpush1.msra.mxu0 0.0
    %476 = vmatprep.subr.mxu0 0.0
    %477 = vmatpush1.msra.mxu0 0.0
    %478 = vmatprep.subr.mxu0 0.0
    %479 = vmatpush1.msra.mxu0 0.0
    %480 = vmatprep.subr.mxu0 0.0
    %481 = vmatpush1.msra.mxu0 0.0
    %482 = vmatprep.subr.mxu0 0.0
    %483 = vmatpush1.msra.mxu0 0.0
    %484 = vmatprep.subr.mxu0 0.0
    %485 = vmatpush1.msra.mxu0 0.0
    %486 = vmatprep.subr.mxu0 0.0
    %487 = vmatpush1.msra.mxu0 0.0
    %488 = vmatprep.subr.mxu0 0.0
    %489 = vmatpush1.msra.mxu0 0.0
    %490 = vmatprep.subr.mxu0 0.0
    %491 = vmatpush1.msra.mxu0 0.0
    %492 = vmatprep.subr.mxu0 0.0
    %493 = vmatpush1.msra.mxu0 0.0
    %494 = vmatprep.subr.mxu0 0.0
    %495 = vmatpush1.msra.mxu0 0.0
    %496 = vmatprep.subr.mxu0 0.0
    %497 = vmatpush1.msra.mxu0 0.0
    %498 = vmatprep.subr.mxu0 0.0
    %499 = vmatpush1.msra.mxu0 0.0
    %500 = vmatprep.subr.mxu0 0.0
    %501 = vmatpush1.msra.mxu0 0.0
    %502 = vmatprep.subr.mxu0 0.0
    %503 = vmatpush1.msra.mxu0 0.0
    %504 = vmatprep.subr.mxu0 0.0
    %505 = vmatpush1.msra.mxu0 0.0
    %506 = vmatprep.subr.mxu0 0.0
    %507 = vmatpush1.msra.mxu0 0.0
    %508 = vmatprep.subr.mxu0 0.0
    %509 = vmatpush1.msra.mxu0 0.0
    %510 = vmatprep.subr.mxu0 0.0
    %511 = vmatpush1.msra.mxu0 0.0
    %512 = vmatprep.subr.mxu0 0.0
    %513 = vmatpush1.msra.mxu0 0.0
    %514 = vmatprep.mubr.f32.mxu0 0.0
    %515 = vmatmul.mubr.f32.gmra.mrb[0].mxu0 %v448
    %v516 = vpop.f32.mrb[0].mxu0
    %v517 = vadd.f32 0.0, %v516
    %v518 = vpop.f32.mrb[0].mxu0
    %v519 = vadd.f32 0.0, %v518
    %520 = vdwg.mxu0
    %v521 = vadd.f32 %v173, %v517
    %v522 = vadd.f32 %v175, %v519
    %v523 = vxor.u32 %v521, 2147483648
    %v524 = vxor.u32 %v522, 2147483648
    %v525 = vmul.f32 %v523, 1.442695
    %v526 = vpow.pop %v525
    %v527 = vmul.f32 %v524, 1.442695
    %v528 = vpow.pop %v527
    %v529 = vadd.f32 %v526, 1.0
    %v530 = vadd.f32 %v528, 1.0
    %v531 = vrcp.pop %v529
    %v532 = vmul.f32 1.0, %v531
    %v533 = vrcp.pop %v530
    %v534 = vmul.f32 1.0, %v533
    %v535 = vtanh.pop %v522
    %v536 = vmul.f32 %v532, %v442
    %v537 = vmul.f32 %v532, %v535
    %539 = vrot.lane.b32.xlu0 %v537, 64
    %v540 = vpop.permute.xlu0 %539
    %v542 = vadd.f32 %v536, %v540
    %v543 = vtanh.pop %v542
    %v544 = vmul.f32 %v534, %v543
    %546 = vrot.lane.b32.xlu0 %v544, 64
    %v547 = vpop.permute.xlu0 %546
    %v548 = vsel %vm227, %v547, 0
    %550 = vmatprep.subr.mxu0 %v208
    %551 = vmatpush1.msra.mxu0 %v207
    %552 = vmatprep.subr.mxu0 %v210
    %553 = vmatpush1.msra.mxu0 %v209
    %554 = vmatprep.subr.mxu0 %v212
    %555 = vmatpush1.msra.mxu0 %v211
    %556 = vmatprep.subr.mxu0 %v214
    %557 = vmatpush1.msra.mxu0 %v213
    %558 = vmatprep.subr.mxu0 %v216
    %559 = vmatpush1.msra.mxu0 %v215
    %560 = vmatprep.subr.mxu0 %v218
    %561 = vmatpush1.msra.mxu0 %v217
    %562 = vmatprep.subr.mxu0 %v220
    %563 = vmatpush1.msra.mxu0 %v219
    %564 = vmatprep.subr.mxu0 %v222
    %565 = vmatpush1.msra.mxu0 %v221
    %566 = vmatprep.subr.mxu0 0.0
    %567 = vmatpush1.msra.mxu0 0.0
    %568 = vmatprep.subr.mxu0 0.0
    %569 = vmatpush1.msra.mxu0 0.0
    %570 = vmatprep.subr.mxu0 0.0
    %571 = vmatpush1.msra.mxu0 0.0
    %572 = vmatprep.subr.mxu0 0.0
    %573 = vmatpush1.msra.mxu0 0.0
    %574 = vmatprep.subr.mxu0 0.0
    %575 = vmatpush1.msra.mxu0 0.0
    %576 = vmatprep.subr.mxu0 0.0
    %577 = vmatpush1.msra.mxu0 0.0
    %578 = vmatprep.subr.mxu0 0.0
    %579 = vmatpush1.msra.mxu0 0.0
    %580 = vmatprep.subr.mxu0 0.0
    %581 = vmatpush1.msra.mxu0 0.0
    %582 = vmatprep.subr.mxu0 0.0
    %583 = vmatpush1.msra.mxu0 0.0
    %584 = vmatprep.subr.mxu0 0.0
    %585 = vmatpush1.msra.mxu0 0.0
    %586 = vmatprep.subr.mxu0 0.0
    %587 = vmatpush1.msra.mxu0 0.0
    %588 = vmatprep.subr.mxu0 0.0
    %589 = vmatpush1.msra.mxu0 0.0
    %590 = vmatprep.subr.mxu0 0.0
    %591 = vmatpush1.msra.mxu0 0.0
    %592 = vmatprep.subr.mxu0 0.0
    %593 = vmatpush1.msra.mxu0 0.0
    %594 = vmatprep.subr.mxu0 0.0
    %595 = vmatpush1.msra.mxu0 0.0
    %596 = vmatprep.subr.mxu0 0.0
    %597 = vmatpush1.msra.mxu0 0.0
    %598 = vmatprep.subr.mxu0 0.0
    %599 = vmatpush1.msra.mxu0 0.0
    %600 = vmatprep.subr.mxu0 0.0
    %601 = vmatpush1.msra.mxu0 0.0
    %602 = vmatprep.subr.mxu0 0.0
    %603 = vmatpush1.msra.mxu0 0.0
    %604 = vmatprep.subr.mxu0 0.0
    %605 = vmatpush1.msra.mxu0 0.0
    %606 = vmatprep.subr.mxu0 0.0
    %607 = vmatpush1.msra.mxu0 0.0
    %608 = vmatprep.subr.mxu0 0.0
    %609 = vmatpush1.msra.mxu0 0.0
    %610 = vmatprep.subr.mxu0 0.0
    %611 = vmatpush1.msra.mxu0 0.0
    %612 = vmatprep.subr.mxu0 0.0
    %613 = vmatpush1.msra.mxu0 0.0
    %614 = vmatprep.mubr.f32.mxu0 0.0
    %615 = vmatmul.mubr.f32.gmra.mrb[0].mxu0 %v548
    %v616 = vpop.f32.mrb[0].mxu0
    %v617 = vadd.f32 0.0, %v616
    %v618 = vpop.f32.mrb[0].mxu0
    %v619 = vadd.f32 0.0, %v618
    %620 = vdwg.mxu0
    %v621 = vadd.f32 %v179, %v617
    %v622 = vadd.f32 %v181, %v619
    %v623 = vxor.u32 %v621, 2147483648
    %v624 = vxor.u32 %v622, 2147483648
    %v625 = vmul.f32 %v623, 1.442695
    %v626 = vpow.pop %v625
    %v627 = vmul.f32 %v624, 1.442695
    %v628 = vpow.pop %v627
    %v629 = vadd.f32 %v626, 1.0
    %v630 = vadd.f32 %v628, 1.0
    %v631 = vrcp.pop %v629
    %v632 = vmul.f32 1.0, %v631
    %v633 = vrcp.pop %v630
    %v634 = vmul.f32 1.0, %v633
    %v635 = vtanh.pop %v622
    %v636 = vmul.f32 %v632, %v542
    %v637 = vmul.f32 %v632, %v635
    %639 = vrot.lane.b32.xlu0 %v637, 64
    %v640 = vpop.permute.xlu0 %639
    %v642 = vadd.f32 %v636, %v640
    %v643 = vtanh.pop %v642
    %v644 = vmul.f32 %v634, %v643
    %646 = vrot.lane.b32.xlu0 %v644, 64
    %v647 = vpop.permute.xlu0 %646
    %v648 = vsel %vm227, %v647, 0
    %650 = vmatprep.subr.mxu0 %v208
    %651 = vmatpush1.msra.mxu0 %v207
    %652 = vmatprep.subr.mxu0 %v210
    %653 = vmatpush1.msra.mxu0 %v209
    %654 = vmatprep.subr.mxu0 %v212
    %655 = vmatpush1.msra.mxu0 %v211
    %656 = vmatprep.subr.mxu0 %v214
    %657 = vmatpush1.msra.mxu0 %v213
    %658 = vmatprep.subr.mxu0 %v216
    %659 = vmatpush1.msra.mxu0 %v215
    %660 = vmatprep.subr.mxu0 %v218
    %661 = vmatpush1.msra.mxu0 %v217
    %662 = vmatprep.subr.mxu0 %v220
    %663 = vmatpush1.msra.mxu0 %v219
    %664 = vmatprep.subr.mxu0 %v222
    %665 = vmatpush1.msra.mxu0 %v221
    %666 = vmatprep.subr.mxu0 0.0
    %667 = vmatpush1.msra.mxu0 0.0
    %668 = vmatprep.subr.mxu0 0.0
    %669 = vmatpush1.msra.mxu0 0.0
    %670 = vmatprep.subr.mxu0 0.0
    %671 = vmatpush1.msra.mxu0 0.0
    %672 = vmatprep.subr.mxu0 0.0
    %673 = vmatpush1.msra.mxu0 0.0
    %674 = vmatprep.subr.mxu0 0.0
    %675 = vmatpush1.msra.mxu0 0.0
    %676 = vmatprep.subr.mxu0 0.0
    %677 = vmatpush1.msra.mxu0 0.0
    %678 = vmatprep.subr.mxu0 0.0
    %679 = vmatpush1.msra.mxu0 0.0
    %680 = vmatprep.subr.mxu0 0.0
    %681 = vmatpush1.msra.mxu0 0.0
    %682 = vmatprep.subr.mxu0 0.0
    %683 = vmatpush1.msra.mxu0 0.0
    %684 = vmatprep.subr.mxu0 0.0
    %685 = vmatpush1.msra.mxu0 0.0
    %686 = vmatprep.subr.mxu0 0.0
    %687 = vmatpush1.msra.mxu0 0.0
    %688 = vmatprep.subr.mxu0 0.0
    %689 = vmatpush1.msra.mxu0 0.0
    %690 = vmatprep.subr.mxu0 0.0
    %691 = vmatpush1.msra.mxu0 0.0
    %692 = vmatprep.subr.mxu0 0.0
    %693 = vmatpush1.msra.mxu0 0.0
    %694 = vmatprep.subr.mxu0 0.0
    %695 = vmatpush1.msra.mxu0 0.0
    %696 = vmatprep.subr.mxu0 0.0
    %697 = vmatpush1.msra.mxu0 0.0
    %698 = vmatprep.subr.mxu0 0.0
    %699 = vmatpush1.msra.mxu0 0.0
    %700 = vmatprep.subr.mxu0 0.0
    %701 = vmatpush1.msra.mxu0 0.0
    %702 = vmatprep.subr.mxu0 0.0
    %703 = vmatpush1.msra.mxu0 0.0
    %704 = vmatprep.subr.mxu0 0.0
    %705 = vmatpush1.msra.mxu0 0.0
    %706 = vmatprep.subr.mxu0 0.0
    %707 = vmatpush1.msra.mxu0 0.0
    %708 = vmatprep.subr.mxu0 0.0
    %709 = vmatpush1.msra.mxu0 0.0
    %710 = vmatprep.subr.mxu0 0.0
    %711 = vmatpush1.msra.mxu0 0.0
    %712 = vmatprep.subr.mxu0 0.0
    %713 = vmatpush1.msra.mxu0 0.0
    %714 = vmatprep.mubr.f32.mxu0 0.0
    %715 = vmatmul.mubr.f32.gmra.mrb[0].mxu0 %v648
    %v716 = vpop.f32.mrb[0].mxu0
    %v717 = vadd.f32 0.0, %v716
    %v718 = vpop.f32.mrb[0].mxu0
    %v719 = vadd.f32 0.0, %v718
    %720 = vdwg.mxu0
    %v721 = vadd.f32 %v185, %v717
    %v722 = vadd.f32 %v187, %v719
    %v723 = vxor.u32 %v721, 2147483648
    %v724 = vxor.u32 %v722, 2147483648
    %v725 = vmul.f32 %v723, 1.442695
    %v726 = vpow.pop %v725
    %v727 = vmul.f32 %v724, 1.442695
    %v728 = vpow.pop %v727
    %v729 = vadd.f32 %v726, 1.0
    %v730 = vadd.f32 %v728, 1.0
    %v731 = vrcp.pop %v729
    %v732 = vmul.f32 1.0, %v731
    %v733 = vrcp.pop %v730
    %v734 = vmul.f32 1.0, %v733
    %v735 = vtanh.pop %v722
    %v736 = vmul.f32 %v732, %v642
    %v737 = vmul.f32 %v732, %v735
    %739 = vrot.lane.b32.xlu0 %v737, 64
    %v740 = vpop.permute.xlu0 %739
    %v742 = vadd.f32 %v736, %v740
    %v743 = vtanh.pop %v742
    %v744 = vmul.f32 %v734, %v743
    %746 = vrot.lane.b32.xlu0 %v744, 64
    %v747 = vpop.permute.xlu0 %746
    %v748 = vsel %vm227, %v747, 0
    %750 = vmatprep.subr.mxu0 %v208
    %751 = vmatpush1.msra.mxu0 %v207
    %752 = vmatprep.subr.mxu0 %v210
    %753 = vmatpush1.msra.mxu0 %v209
    %754 = vmatprep.subr.mxu0 %v212
    %755 = vmatpush1.msra.mxu0 %v211
    %756 = vmatprep.subr.mxu0 %v214
    %757 = vmatpush1.msra.mxu0 %v213
    %758 = vmatprep.subr.mxu0 %v216
    %759 = vmatpush1.msra.mxu0 %v215
    %760 = vmatprep.subr.mxu0 %v218
    %761 = vmatpush1.msra.mxu0 %v217
    %762 = vmatprep.subr.mxu0 %v220
    %763 = vmatpush1.msra.mxu0 %v219
    %764 = vmatprep.subr.mxu0 %v222
    %765 = vmatpush1.msra.mxu0 %v221
    %766 = vmatprep.subr.mxu0 0.0
    %767 = vmatpush1.msra.mxu0 0.0
    %768 = vmatprep.subr.mxu0 0.0
    %769 = vmatpush1.msra.mxu0 0.0
    %770 = vmatprep.subr.mxu0 0.0
    %771 = vmatpush1.msra.mxu0 0.0
    %772 = vmatprep.subr.mxu0 0.0
    %773 = vmatpush1.msra.mxu0 0.0
    %774 = vmatprep.subr.mxu0 0.0
    %775 = vmatpush1.msra.mxu0 0.0
    %776 = vmatprep.subr.mxu0 0.0
    %777 = vmatpush1.msra.mxu0 0.0
    %778 = vmatprep.subr.mxu0 0.0
    %779 = vmatpush1.msra.mxu0 0.0
    %780 = vmatprep.subr.mxu0 0.0
    %781 = vmatpush1.msra.mxu0 0.0
    %782 = vmatprep.subr.mxu0 0.0
    %783 = vmatpush1.msra.mxu0 0.0
    %784 = vmatprep.subr.mxu0 0.0
    %785 = vmatpush1.msra.mxu0 0.0
    %786 = vmatprep.subr.mxu0 0.0
    %787 = vmatpush1.msra.mxu0 0.0
    %788 = vmatprep.subr.mxu0 0.0
    %789 = vmatpush1.msra.mxu0 0.0
    %790 = vmatprep.subr.mxu0 0.0
    %791 = vmatpush1.msra.mxu0 0.0
    %792 = vmatprep.subr.mxu0 0.0
    %793 = vmatpush1.msra.mxu0 0.0
    %794 = vmatprep.subr.mxu0 0.0
    %795 = vmatpush1.msra.mxu0 0.0
    %796 = vmatprep.subr.mxu0 0.0
    %797 = vmatpush1.msra.mxu0 0.0
    %798 = vmatprep.subr.mxu0 0.0
    %799 = vmatpush1.msra.mxu0 0.0
    %800 = vmatprep.subr.mxu0 0.0
    %801 = vmatpush1.msra.mxu0 0.0
    %802 = vmatprep.subr.mxu0 0.0
    %803 = vmatpush1.msra.mxu0 0.0
    %804 = vmatprep.subr.mxu0 0.0
    %805 = vmatpush1.msra.mxu0 0.0
    %806 = vmatprep.subr.mxu0 0.0
    %807 = vmatpush1.msra.mxu0 0.0
    %808 = vmatprep.subr.mxu0 0.0
    %809 = vmatpush1.msra.mxu0 0.0
    %810 = vmatprep.subr.mxu0 0.0
    %811 = vmatpush1.msra.mxu0 0.0
    %812 = vmatprep.subr.mxu0 0.0
    %813 = vmatpush1.msra.mxu0 0.0
    %814 = vmatprep.mubr.f32.mxu0 0.0
    %815 = vmatmul.mubr.f32.gmra.mrb[0].mxu0 %v748
    %v816 = vpop.f32.mrb[0].mxu0
    %v817 = vadd.f32 0.0, %v816
    %v818 = vpop.f32.mrb[0].mxu0
    %v819 = vadd.f32 0.0, %v818
    %820 = vdwg.mxu0
    %v821 = vadd.f32 %v191, %v817
    %v822 = vadd.f32 %v193, %v819
    %v823 = vxor.u32 %v821, 2147483648
    %v824 = vxor.u32 %v822, 2147483648
    %v825 = vmul.f32 %v823, 1.442695
    %v826 = vpow.pop %v825
    %v827 = vmul.f32 %v824, 1.442695
    %v828 = vpow.pop %v827
    %v829 = vadd.f32 %v826, 1.0
    %v830 = vadd.f32 %v828, 1.0
    %v831 = vrcp.pop %v829
    %v832 = vmul.f32 1.0, %v831
    %v833 = vrcp.pop %v830
    %v834 = vmul.f32 1.0, %v833
    %v835 = vtanh.pop %v822
    %v836 = vmul.f32 %v832, %v742
    %v837 = vmul.f32 %v832, %v835
    %839 = vrot.lane.b32.xlu0 %v837, 64
    %v840 = vpop.permute.xlu0 %839
    %v842 = vadd.f32 %v836, %v840
    %v843 = vtanh.pop %v842
    %v844 = vmul.f32 %v834, %v843
    %846 = vrot.lane.b32.xlu0 %v844, 64
    %v847 = vpop.permute.xlu0 %846
    %v848 = vsel %vm227, %v847, 0
    %850 = vmatprep.subr.mxu0 %v208
    %851 = vmatpush1.msra.mxu0 %v207
    %852 = vmatprep.subr.mxu0 %v210
    %853 = vmatpush1.msra.mxu0 %v209
    %854 = vmatprep.subr.mxu0 %v212
    %855 = vmatpush1.msra.mxu0 %v211
    %856 = vmatprep.subr.mxu0 %v214
    %857 = vmatpush1.msra.mxu0 %v213
    %858 = vmatprep.subr.mxu0 %v216
    %859 = vmatpush1.msra.mxu0 %v215
    %860 = vmatprep.subr.mxu0 %v218
    %861 = vmatpush1.msra.mxu0 %v217
    %862 = vmatprep.subr.mxu0 %v220
    %863 = vmatpush1.msra.mxu0 %v219
    %864 = vmatprep.subr.mxu0 %v222
    %865 = vmatpush1.msra.mxu0 %v221
    %866 = vmatprep.subr.mxu0 0.0
    %867 = vmatpush1.msra.mxu0 0.0
    %868 = vmatprep.subr.mxu0 0.0
    %869 = vmatpush1.msra.mxu0 0.0
    %870 = vmatprep.subr.mxu0 0.0
    %871 = vmatpush1.msra.mxu0 0.0
    %872 = vmatprep.subr.mxu0 0.0
    %873 = vmatpush1.msra.mxu0 0.0
    %874 = vmatprep.subr.mxu0 0.0
    %875 = vmatpush1.msra.mxu0 0.0
    %876 = vmatprep.subr.mxu0 0.0
    %877 = vmatpush1.msra.mxu0 0.0
    %878 = vmatprep.subr.mxu0 0.0
    %879 = vmatpush1.msra.mxu0 0.0
    %880 = vmatprep.subr.mxu0 0.0
    %881 = vmatpush1.msra.mxu0 0.0
    %882 = vmatprep.subr.mxu0 0.0
    %883 = vmatpush1.msra.mxu0 0.0
    %884 = vmatprep.subr.mxu0 0.0
    %885 = vmatpush1.msra.mxu0 0.0
    %886 = vmatprep.subr.mxu0 0.0
    %887 = vmatpush1.msra.mxu0 0.0
    %888 = vmatprep.subr.mxu0 0.0
    %889 = vmatpush1.msra.mxu0 0.0
    %890 = vmatprep.subr.mxu0 0.0
    %891 = vmatpush1.msra.mxu0 0.0
    %892 = vmatprep.subr.mxu0 0.0
    %893 = vmatpush1.msra.mxu0 0.0
    %894 = vmatprep.subr.mxu0 0.0
    %895 = vmatpush1.msra.mxu0 0.0
    %896 = vmatprep.subr.mxu0 0.0
    %897 = vmatpush1.msra.mxu0 0.0
    %898 = vmatprep.subr.mxu0 0.0
    %899 = vmatpush1.msra.mxu0 0.0
    %900 = vmatprep.subr.mxu0 0.0
    %901 = vmatpush1.msra.mxu0 0.0
    %902 = vmatprep.subr.mxu0 0.0
    %903 = vmatpush1.msra.mxu0 0.0
    %904 = vmatprep.subr.mxu0 0.0
    %905 = vmatpush1.msra.mxu0 0.0
    %906 = vmatprep.subr.mxu0 0.0
    %907 = vmatpush1.msra.mxu0 0.0
    %908 = vmatprep.subr.mxu0 0.0
    %909 = vmatpush1.msra.mxu0 0.0
    %910 = vmatprep.subr.mxu0 0.0
    %911 = vmatpush1.msra.mxu0 0.0
    %912 = vmatprep.subr.mxu0 0.0
    %913 = vmatpush1.msra.mxu0 0.0
    %914 = vmatprep.mubr.f32.mxu0 0.0
    %915 = vmatmul.mubr.f32.gmra.mrb[0].mxu0 %v848
    %v916 = vpop.f32.mrb[0].mxu0
    %v917 = vadd.f32 0.0, %v916
    %v918 = vpop.f32.mrb[0].mxu0
    %v919 = vadd.f32 0.0, %v918
    %920 = vdwg.mxu0
    %v921 = vadd.f32 %v197, %v917
    %v922 = vadd.f32 %v199, %v919
    %v923 = vxor.u32 %v921, 2147483648
    %v924 = vxor.u32 %v922, 2147483648
    %v925 = vmul.f32 %v923, 1.442695
    %v926 = vpow.pop %v925
    %v927 = vmul.f32 %v924, 1.442695
    %v928 = vpow.pop %v927
    %v929 = vadd.f32 %v926, 1.0
    %v930 = vadd.f32 %v928, 1.0
    %v931 = vrcp.pop %v929
    %v932 = vmul.f32 1.0, %v931
    %v933 = vrcp.pop %v930
    %v934 = vmul.f32 1.0, %v933
    %v935 = vtanh.pop %v922
    %v936 = vmul.f32 %v932, %v842
    %v937 = vmul.f32 %v932, %v935
    %939 = vrot.lane.b32.xlu0 %v937, 64
    %v940 = vpop.permute.xlu0 %939
    %v942 = vadd.f32 %v936, %v940
    %v943 = vtanh.pop %v942
    %v944 = vmul.f32 %v934, %v943
    %946 = vrot.lane.b32.xlu0 %v944, 64
    %v947 = vpop.permute.xlu0 %946
    %v948 = vsel %vm227, %v947, 0
    %950 = vmatprep.subr.mxu0 %v208
    %951 = vmatpush1.msra.mxu0 %v207
    %952 = vmatprep.subr.mxu0 %v210
    %953 = vmatpush1.msra.mxu0 %v209
    %954 = vmatprep.subr.mxu0 %v212
    %955 = vmatpush1.msra.mxu0 %v211
    %956 = vmatprep.subr.mxu0 %v214
    %957 = vmatpush1.msra.mxu0 %v213
    %958 = vmatprep.subr.mxu0 %v216
    %959 = vmatpush1.msra.mxu0 %v215
    %960 = vmatprep.subr.mxu0 %v218
    %961 = vmatpush1.msra.mxu0 %v217
    %962 = vmatprep.subr.mxu0 %v220
    %963 = vmatpush1.msra.mxu0 %v219
    %964 = vmatprep.subr.mxu0 %v222
    %965 = vmatpush1.msra.mxu0 %v221
    %966 = vmatprep.subr.mxu0 0.0
    %967 = vmatpush1.msra.mxu0 0.0
    %968 = vmatprep.subr.mxu0 0.0
    %969 = vmatpush1.msra.mxu0 0.0
    %970 = vmatprep.subr.mxu0 0.0
    %971 = vmatpush1.msra.mxu0 0.0
    %972 = vmatprep.subr.mxu0 0.0
    %973 = vmatpush1.msra.mxu0 0.0
    %974 = vmatprep.subr.mxu0 0.0
    %975 = vmatpush1.msra.mxu0 0.0
    %976 = vmatprep.subr.mxu0 0.0
    %977 = vmatpush1.msra.mxu0 0.0
    %978 = vmatprep.subr.mxu0 0.0
    %979 = vmatpush1.msra.mxu0 0.0
    %980 = vmatprep.subr.mxu0 0.0
    %981 = vmatpush1.msra.mxu0 0.0
    %982 = vmatprep.subr.mxu0 0.0
    %983 = vmatpush1.msra.mxu0 0.0
    %984 = vmatprep.subr.mxu0 0.0
    %985 = vmatpush1.msra.mxu0 0.0
    %986 = vmatprep.subr.mxu0 0.0
    %987 = vmatpush1.msra.mxu0 0.0
    %988 = vmatprep.subr.mxu0 0.0
    %989 = vmatpush1.msra.mxu0 0.0
    %990 = vmatprep.subr.mxu0 0.0
    %991 = vmatpush1.msra.mxu0 0.0
    %992 = vmatprep.subr.mxu0 0.0
    %993 = vmatpush1.msra.mxu0 0.0
    %994 = vmatprep.subr.mxu0 0.0
    %995 = vmatpush1.msra.mxu0 0.0
    %996 = vmatprep.subr.mxu0 0.0
    %997 = vmatpush1.msra.mxu0 0.0
    %998 = vmatprep.subr.mxu0 0.0
    %999 = vmatpush1.msra.mxu0 0.0
    %1000 = vmatprep.subr.mxu0 0.0
    %1001 = vmatpush1.msra.mxu0 0.0
    %1002 = vmatprep.subr.mxu0 0.0
    %1003 = vmatpush1.msra.mxu0 0.0
    %1004 = vmatprep.subr.mxu0 0.0
    %1005 = vmatpush1.msra.mxu0 0.0
    %1006 = vmatprep.subr.mxu0 0.0
    %1007 = vmatpush1.msra.mxu0 0.0
    %1008 = vmatprep.subr.mxu0 0.0
    %1009 = vmatpush1.msra.mxu0 0.0
    %1010 = vmatprep.subr.mxu0 0.0
    %1011 = vmatpush1.msra.mxu0 0.0
    %1012 = vmatprep.subr.mxu0 0.0
    %1013 = vmatpush1.msra.mxu0 0.0
    %1014 = vmatprep.mubr.f32.mxu0 0.0
    %1015 = vmatmul.mubr.f32.gmra.mrb[0].mxu0 %v948
    %v1016 = vpop.f32.mrb[0].mxu0
    %v1017 = vadd.f32 0.0, %v1016
    %v1018 = vpop.f32.mrb[0].mxu0
    %v1019 = vadd.f32 0.0, %v1018
    %1020 = vdwg.mxu0
    %v1021 = vadd.f32 %v203, %v1017
    %v1022 = vadd.f32 %v205, %v1019
    %v1023 = vxor.u32 %v1021, 2147483648
    %v1024 = vxor.u32 %v1022, 2147483648
    %v1025 = vmul.f32 %v1023, 1.442695
    %v1026 = vpow.pop %v1025
    %v1027 = vmul.f32 %v1024, 1.442695
    %v1028 = vpow.pop %v1027
    %v1029 = vadd.f32 %v1026, 1.0
    %v1030 = vadd.f32 %v1028, 1.0
    %v1031 = vrcp.pop %v1029
    %v1032 = vmul.f32 1.0, %v1031
    %v1033 = vrcp.pop %v1030
    %v1034 = vmul.f32 1.0, %v1033
    %v1035 = vtanh.pop %v1022
    %v1036 = vmul.f32 %v1032, %v942
    %v1037 = vmul.f32 %v1032, %v1035
    %1039 = vrot.lane.b32.xlu0 %v1037, 64
    %v1040 = vpop.permute.xlu0 %1039
    %v1042 = vadd.f32 %v1036, %v1040
    %v1043 = vtanh.pop %v1042
    %v1044 = vmul.f32 %v1034, %v1043
    %1046 = vrot.lane.b32.xlu0 %v1044, 64
    %v1047 = vpop.permute.xlu0 %1046
    %v1048 = vsel %vm227, %v1047, 0
    %1050 = vmatprep.subr.mxu0 %v208
    %1051 = vmatpush1.msra.mxu0 %v207
    %1052 = vmatprep.subr.mxu0 %v210
    %1053 = vmatpush1.msra.mxu0 %v209
    %1054 = vmatprep.subr.mxu0 %v212
    %1055 = vmatpush1.msra.mxu0 %v211
    %1056 = vmatprep.subr.mxu0 %v214
    %1057 = vmatpush1.msra.mxu0 %v213
    %1058 = vmatprep.subr.mxu0 %v216
    %1059 = vmatpush1.msra.mxu0 %v215
    %1060 = vmatprep.subr.mxu0 %v218
    %1061 = vmatpush1.msra.mxu0 %v217
    %1062 = vmatprep.subr.mxu0 %v220
    %1063 = vmatpush1.msra.mxu0 %v219
    %1064 = vmatprep.subr.mxu0 %v222
    %1065 = vmatpush1.msra.mxu0 %v221
    %1066 = vmatprep.subr.mxu0 0.0
    %1067 = vmatpush1.msra.mxu0 0.0
    %1068 = vmatprep.subr.mxu0 0.0
    %1069 = vmatpush1.msra.mxu0 0.0
    %1070 = vmatprep.subr.mxu0 0.0
    %1071 = vmatpush1.msra.mxu0 0.0
    %1072 = vmatprep.subr.mxu0 0.0
    %1073 = vmatpush1.msra.mxu0 0.0
    %1074 = vmatprep.subr.mxu0 0.0
    %1075 = vmatpush1.msra.mxu0 0.0
    %1076 = vmatprep.subr.mxu0 0.0
    %1077 = vmatpush1.msra.mxu0 0.0
    %1078 = vmatprep.subr.mxu0 0.0
    %1079 = vmatpush1.msra.mxu0 0.0
    %1080 = vmatprep.subr.mxu0 0.0
    %1081 = vmatpush1.msra.mxu0 0.0
    %1082 = vmatprep.subr.mxu0 0.0
    %1083 = vmatpush1.msra.mxu0 0.0
    %1084 = vmatprep.subr.mxu0 0.0
    %1085 = vmatpush1.msra.mxu0 0.0
    %1086 = vmatprep.subr.mxu0 0.0
    %1087 = vmatpush1.msra.mxu0 0.0
    %1088 = vmatprep.subr.mxu0 0.0
    %1089 = vmatpush1.msra.mxu0 0.0
    %1090 = vmatprep.subr.mxu0 0.0
    %1091 = vmatpush1.msra.mxu0 0.0
    %1092 = vmatprep.subr.mxu0 0.0
    %1093 = vmatpush1.msra.mxu0 0.0
    %1094 = vmatprep.subr.mxu0 0.0
    %1095 = vmatpush1.msra.mxu0 0.0
    %1096 = vmatprep.subr.mxu0 0.0
    %1097 = vmatpush1.msra.mxu0 0.0
    %1098 = vmatprep.subr.mxu0 0.0
    %1099 = vmatpush1.msra.mxu0 0.0
    %1100 = vmatprep.subr.mxu0 0.0
    %1101 = vmatpush1.msra.mxu0 0.0
    %1102 = vmatprep.subr.mxu0 0.0
    %1103 = vmatpush1.msra.mxu0 0.0
    %1104 = vmatprep.subr.mxu0 0.0
    %1105 = vmatpush1.msra.mxu0 0.0
    %1106 = vmatprep.subr.mxu0 0.0
    %1107 = vmatpush1.msra.mxu0 0.0
    %1108 = vmatprep.subr.mxu0 0.0
    %1109 = vmatpush1.msra.mxu0 0.0
    %1110 = vmatprep.subr.mxu0 0.0
    %1111 = vmatpush1.msra.mxu0 0.0
    %1112 = vmatprep.subr.mxu0 0.0
    %1113 = vmatpush1.msra.mxu0 0.0
    %1114 = vmatprep.mubr.f32.mxu0 0.0
    %1115 = vmatmul.mubr.f32.gmra.mrb[0].mxu0 %v1048
    %v1116 = vpop.f32.mrb[0].mxu0
    %v1117 = vadd.f32 0.0, %v1116
    %v1118 = vpop.f32.mrb[0].mxu0
    %v1119 = vadd.f32 0.0, %v1118
    %1120 = vdwg.mxu0
    %v1121 = vadd.f32 %v203, %v1117
    %v1122 = vadd.f32 %v205, %v1119
    %v1123 = vxor.u32 %v1121, 2147483648
    %v1124 = vxor.u32 %v1122, 2147483648
    %v1125 = vmul.f32 %v1123, 1.442695
    %v1126 = vpow.pop %v1125
    %v1127 = vmul.f32 %v1124, 1.442695
    %v1128 = vpow.pop %v1127
    %v1129 = vadd.f32 %v1126, 1.0
    %v1130 = vadd.f32 %v1128, 1.0
    %v1131 = vrcp.pop %v1129
    %v1132 = vmul.f32 1.0, %v1131
    %v1133 = vrcp.pop %v1130
    %v1134 = vmul.f32 1.0, %v1133
    %v1135 = vtanh.pop %v1122
    %v1136 = vmul.f32 %v1132, %v1042
    %v1137 = vmul.f32 %v1132, %v1135
    %1139 = vrot.lane.b32.xlu0 %v1137, 64
    %v1140 = vpop.permute.xlu0 %1139
    %v1142 = vadd.f32 %v1136, %v1140
    %v1143 = vtanh.pop %v1142
    %v1144 = vmul.f32 %v1134, %v1143
    %vm1145 = vcmp.ge.s32.totalorder %v226, 32
    %vm1146 = vcmp.lt.s32.totalorder %v226, 64
    %vm1147 = vmand %vm1145, %vm1146
    %1149 = vrot.lane.b32.xlu0 %v1144, 64
    %v1150 = vpop.permute.xlu0 %1149
    %v1153 = vsel %vm1147, %v1150, %v1047
    %1155 = vrot.lane.b32.xlu0 %v1142, 64
    %v1156 = vpop.permute.xlu0 %1155
    %1159 = vrot.lane.b32.xlu0 %v1042, 64
    %v1160 = vpop.permute.xlu0 %1159
    %v1162 = vsel %vm1147, %v1156, %v1160
    %1167 = vrot.lane.b32.xlu0 %v1153, 64
    %v1168 = vpop.permute.xlu0 %1167
    %v1170 = vsel %vm227, %v447, %v544
    %v1171 = vsel %vm227, %v647, %v744
    %v1172 = vsel %vm227, %v847, %v944
    %v1173 = vsel %vm227, %v1047, %v1168
    %1174 = vst [vmem:[#allocation5] sm:$0xff] %v1170
    %1175 = vst [vmem:[#allocation5 + $0x8] sm:$0xff] %v1171
    %1176 = vst [vmem:[#allocation5 + $0x10] sm:$0xff] %v1172
    %1177 = vst [vmem:[#allocation5 + $0x18] sm:$0xff] %v1173
    %1179 = vrot.lane.b32.xlu0 %v1162, 64
    %v1180 = vpop.permute.xlu0 %1179
    %v1182 = vsel %vm227, %v1153, %v1180
    %1183 = vst [vmem:[#allocation6] sm:$0xff] %v1182
    // Predicated region
    $region30: #{tpu_custom_call.1} parent=1 // pred_check
      _
    $region31: #{tpu_custom_call.1} parent=1 // pred_check_branch
      %1185 = sbr.rel (0) target = $region33
    $region32: #{tpu_custom_call.1} parent=1 // pred_region
      %s1187 = ssub.s32 512, 512
      %1188 = vsyncadd [#allocation4], %s1187
      %s1190 = sshll.u32 [#allocation5], 4
      %s1191 = int_to_ptr.vmem [resolvable:$true] %s1190
      %1193 = dma.vmem_to_hbm [thread:$0]  %s1191, 512, %s6, [#allocation4]
    $region33: #{tpu_custom_call.1} parent=1 // pred_fallthru
      _
    // Predicated region
    $region34: #{tpu_custom_call.1} parent=1 // pred_check
      _
    $region35: #{tpu_custom_call.1} parent=1 // pred_check_branch
      %1195 = sbr.rel (0) target = $region37
    $region36: #{tpu_custom_call.1} parent=1 // pred_region
      %s1197 = ssub.s32 128, 128
      %1198 = vsyncadd [#allocation7], %s1197
      %s1200 = sshll.u32 [#allocation6], 4
      %s1201 = int_to_ptr.vmem [resolvable:$true] %s1200
      %1203 = dma.vmem_to_hbm [thread:$0]  %s1201, 128, %s7, [#allocation7]
    $region37: #{tpu_custom_call.1} parent=1 // pred_fallthru
      _
    // Predicated region
    $region38: #{tpu_custom_call.1} parent=1 // pred_check
      _
    $region39: #{tpu_custom_call.1} parent=1 // pred_check_branch
      %1205 = sbr.rel (0) target = $region41
    $region40: #{tpu_custom_call.1} parent=1 // pred_region
      %1206 = dma.done [#allocation4], 512
    $region41: #{tpu_custom_call.1} parent=1 // pred_fallthru
      _
    // Predicated region
    $region42: #{tpu_custom_call.1} parent=1 // pred_check
      _
    $region43: #{tpu_custom_call.1} parent=1 // pred_check_branch
      %1208 = sbr.rel (0) target = $region45
    $region44: #{tpu_custom_call.1} parent=1 // pred_region
      %1209 = dma.done [#allocation7], 128
    $region45: #{tpu_custom_call.1} parent=1 // pred_fallthru
      _
    %1210 = vsyncpa [#allocation3], 1
    %1211 = vsyncpa [#allocation4], 1
    %1212 = vsyncpa [#allocation7], 1

</llo_original>
